<compile_context>
chip_gen: v7x
topology: tpu7x:2x2x1
jax: 0.10.0
libtpu: 0.0.40
codegen_flags: <defaults>
</compile_context>

<pallas_src>
import math

import jax
import jax.numpy as jnp
from jax.experimental import pallas as pl
from jax.experimental.pallas import tpu as pltpu


# PyTorch-structured parameters: ordinary Linear weights pre-transposed to
# (in, out) so we compute x @ W + b; concat-input layers pre-split; the tiny
# heads t_w3 (1, hidden) / yd_w3 (2, hidden) keep the (out, in) orientation so
# their rows broadcast against activations; biases stored as (1, n).
_PARAM_NAMES = (
    # fc_t: 3 x [Linear(h, h), ELU, Dropout(0)] + Linear(h, 1)
    "t_w0", "t_b0", "t_w1", "t_b1", "t_w2", "t_b2", "t_w3", "t_b3",
    # t_embedding: Linear(1, te)
    "te_w", "te_b",
    # fc_shared: Linear(d + te, h) split into (d,h)+(te,h), then 2 x Linear(h, h)
    "s_w0x", "s_w0t", "s_b0", "s_w1", "s_b1", "s_w2", "s_b2",
    # fc_yd: Linear(h + te, h) split, 2 x Linear(h, h), Linear(h, 2)
    "yd_w0h", "yd_w0t", "yd_b0", "yd_w1", "yd_b1", "yd_w2", "yd_b2",
    "yd_w3", "yd_b3",
    # yd_embedding: Linear(2, ye)
    "ye_w", "ye_b",
    # fc_mu / fc_logvar on concat([h_shared, t_embed, yd_embed]) -> split weights
    "mu_wh", "mu_wt", "mu_wy", "mu_b",
    "lv_wh", "lv_wt", "lv_wy", "lv_b",
)

# Kernel-side parameters after wrapper-side (exact) algebraic folding:
#  * fc_mu / fc_logvar fused into one (h, 2L) head ("ml_*"),
#  * t_embedding folded through its three affine consumers -> rank-1 rows,
#  * yd_embedding folded through the fused mu/logvar head -> two rank-1 rows.
_KERNEL_PARAM_NAMES = (
    "t_w0", "t_b0", "t_w1", "t_b1", "t_w2", "t_b2", "t_w3", "t_b3",
    "s_w0x", "s_t_row", "s_b0", "s_w1", "s_b1", "s_w2", "s_b2",
    "yd_w0h", "yd_t_row", "yd_b0", "yd_w1", "yd_b1", "yd_w2", "yd_b2",
    "yd_w3", "yd_b3",
    "ml_wh", "ml_t_row", "ml_y_rows", "ml_b",
)


def _elu(v):
    # ELU(alpha=1): x if x > 0 else exp(x) - 1
    return jnp.where(v > 0, v, jnp.exp(v) - 1.0)


def _dot(a, b):
    return jnp.dot(a, b, preferred_element_type=jnp.float32)


def _cevae_encoder_kernel(x_ref, *refs):
    n_w = len(_KERNEL_PARAM_NAMES)
    w = dict(zip(_KERNEL_PARAM_NAMES, refs[:n_w]))
    ml_ref, yd_ref, t_ref = refs[n_w:]

    x = x_ref[...].astype(jnp.float32)

    # ---- fc_t (Dropout p=0 -> identity) -> t_pred ----
    h = _elu(_dot(x, w["t_w0"][...]) + w["t_b0"][...])
    h = _elu(_dot(h, w["t_w1"][...]) + w["t_b1"][...])
    h = _elu(_dot(h, w["t_w2"][...]) + w["t_b2"][...])
    # final Linear(h, 1): broadcast-mul + lane reduce (avoids an N=1 MXU op)
    t_pred = jnp.sum(h * w["t_w3"][...], axis=-1, keepdims=True) + w["t_b3"][...]

    # ---- fc_shared on concat([x, t_embed]) ----
    # t_embedding folded: t_embed @ W0t == t_pred * (te_w @ W0t) + te_b @ W0t
    h = _elu(_dot(x, w["s_w0x"][...]) + t_pred * w["s_t_row"][...]
             + w["s_b0"][...])
    h = _elu(_dot(h, w["s_w1"][...]) + w["s_b1"][...])
    h_shared = _elu(_dot(h, w["s_w2"][...]) + w["s_b2"][...])

    # ---- fc_yd on concat([h_shared, t_embed]) ----
    h = _elu(_dot(h_shared, w["yd_w0h"][...]) + t_pred * w["yd_t_row"][...]
             + w["yd_b0"][...])
    h = _elu(_dot(h, w["yd_w1"][...]) + w["yd_b1"][...])
    h = _elu(_dot(h, w["yd_w2"][...]) + w["yd_b2"][...])
    # final Linear(h, 2): two rank-1 reductions (no masked tiny-N matmul)
    yd0 = jnp.sum(h * w["yd_w3"][0:1, :], axis=-1, keepdims=True) + w["yd_b3"][:, 0:1]
    yd1 = jnp.sum(h * w["yd_w3"][1:2, :], axis=-1, keepdims=True) + w["yd_b3"][:, 1:2]

    # ---- fused fc_mu || fc_logvar head on concat([h_shared, t_embed, yd_embed])
    # (t_embedding and yd_embedding contributions folded into rank-1 updates)
    ml = (_dot(h_shared, w["ml_wh"][...])
          + t_pred * w["ml_t_row"][...]
          + yd0 * w["ml_y_rows"][0:1, :]
          + yd1 * w["ml_y_rows"][1:2, :]
          + w["ml_b"][...])

    ml_ref[...] = ml.astype(ml_ref.dtype)
    yd_ref[:, 0:1] = yd0.astype(yd_ref.dtype)
    yd_ref[:, 1:2] = yd1.astype(yd_ref.dtype)
    t_ref[...] = t_pred.astype(t_ref.dtype)


def _fold_kernel_params(params):
    """Exact algebraic folding of the PyTorch-structured params into the
    kernel's fused/folded parameter set (tiny weight-sized ops, hoisted by
    jit; order follows _KERNEL_PARAM_NAMES)."""
    p = {k: v.astype(jnp.float32) for k, v in params.items()}

    # Fuse fc_mu / fc_logvar along the output dim -> one 2L-wide head.
    ml_wh = jnp.concatenate([p["mu_wh"], p["lv_wh"]], axis=1)
    ml_wt = jnp.concatenate([p["mu_wt"], p["lv_wt"]], axis=1)
    ml_wy = jnp.concatenate([p["mu_wy"], p["lv_wy"]], axis=1)
    ml_b = jnp.concatenate([p["mu_b"], p["lv_b"]], axis=1)

    # Fold t_embedding (Linear(1, te)) through its affine consumers:
    #   t_embed @ W == t_pred * (te_w @ W) + te_b @ W
    s_t_row = p["te_w"] @ p["s_w0t"]
    s_b0 = p["s_b0"] + p["te_b"] @ p["s_w0t"]
    yd_t_row = p["te_w"] @ p["yd_w0t"]
    yd_b0 = p["yd_b0"] + p["te_b"] @ p["yd_w0t"]
    ml_t_row = p["te_w"] @ ml_wt

    # Fold yd_embedding (Linear(2, ye)) through the fused head:
    #   yd_embed @ W == yd0 * (ye_w[0] @ W) + yd1 * (ye_w[1] @ W) + ye_b @ W
    ml_y_rows = p["ye_w"] @ ml_wy
    ml_b = ml_b + p["te_b"] @ ml_wt + p["ye_b"] @ ml_wy

    folded = {
        "t_w0": p["t_w0"], "t_b0": p["t_b0"], "t_w1": p["t_w1"], "t_b1": p["t_b1"],
        "t_w2": p["t_w2"], "t_b2": p["t_b2"], "t_w3": p["t_w3"], "t_b3": p["t_b3"],
        "s_w0x": p["s_w0x"], "s_t_row": s_t_row, "s_b0": s_b0,
        "s_w1": p["s_w1"], "s_b1": p["s_b1"], "s_w2": p["s_w2"], "s_b2": p["s_b2"],
        "yd_w0h": p["yd_w0h"], "yd_t_row": yd_t_row, "yd_b0": yd_b0,
        "yd_w1": p["yd_w1"], "yd_b1": p["yd_b1"],
        "yd_w2": p["yd_w2"], "yd_b2": p["yd_b2"],
        "yd_w3": p["yd_w3"], "yd_b3": p["yd_b3"],
        "ml_wh": ml_wh, "ml_t_row": ml_t_row, "ml_y_rows": ml_y_rows, "ml_b": ml_b,
    }
    return [folded[n] for n in _KERNEL_PARAM_NAMES]


def init_cevae_encoder_params(key, input_dim, latent_dim, hidden_dim=128,
                              t_embed_dim=8, yd_embed_dim=8, dtype=jnp.float32):
    d, h, L, te, ye = input_dim, hidden_dim, latent_dim, t_embed_dim, yd_embed_dim
    shapes = {
        "t_w0": (h, h), "t_b0": (1, h), "t_w1": (h, h), "t_b1": (1, h),
        "t_w2": (h, h), "t_b2": (1, h), "t_w3": (1, h), "t_b3": (1, 1),
        "te_w": (1, te), "te_b": (1, te),
        "s_w0x": (d, h), "s_w0t": (te, h), "s_b0": (1, h),
        "s_w1": (h, h), "s_b1": (1, h), "s_w2": (h, h), "s_b2": (1, h),
        "yd_w0h": (h, h), "yd_w0t": (te, h), "yd_b0": (1, h),
        "yd_w1": (h, h), "yd_b1": (1, h), "yd_w2": (h, h), "yd_b2": (1, h),
        "yd_w3": (2, h), "yd_b3": (1, 2),
        "ye_w": (2, ye), "ye_b": (1, ye),
        "mu_wh": (h, L), "mu_wt": (te, L), "mu_wy": (ye, L), "mu_b": (1, L),
        "lv_wh": (h, L), "lv_wt": (te, L), "lv_wy": (ye, L), "lv_b": (1, L),
    }
    keys = jax.random.split(key, len(_PARAM_NAMES))
    params = {}
    for name, k in zip(_PARAM_NAMES, keys):
        shp = shapes[name]
        if "_b" in name:
            params[name] = (0.05 * jax.random.normal(k, shp)).astype(dtype)
        else:
            scale = 1.0 / math.sqrt(max(shp))
            params[name] = (scale * jax.random.normal(k, shp)).astype(dtype)
    return params


def cevae_encoder(x, params, *, block_b=None, t_gt=None):
    """Pallas equivalent of CEVAE_Encoder.forward(x) (t_gt=None, eval mode)."""
    if t_gt is not None:
        # TODO(synk): t_gt path not fused (would bypass fc_t inside the kernel).
        raise NotImplementedError("only the t_gt=None branch is implemented")

    B, d = x.shape
    h = params["s_w1"].shape[0]
    L = params["mu_wh"].shape[1]
    te = params["te_w"].shape[1]
    ye = params["ye_w"].shape[1]
    two_L = 2 * L
    out_dtype = x.dtype

    # Batch tile: multiple of 8 sublanes, capped so per-tile footprint stays tiny.
    if block_b is None:
        block_b = min(256, max(8, B))
    block_b = max(8, (block_b // 8) * 8)
    Bp = pl.cdiv(B, block_b) * block_b
    if Bp != B:
        x = jnp.pad(x, ((0, Bp - B), (0, 0)))

    grid = (Bp // block_b,)
    weight_list = _fold_kernel_params(params)

    def full_2d(p):
        # Whole weight as one block; constant index_map -> fetched once, resident.
        return pl.BlockSpec(p.shape, lambda i: (0, 0))

    in_specs = ([pl.BlockSpec((block_b, d), lambda i: (i, 0))]
                + [full_2d(p) for p in weight_list])

    out_shape = (
        jax.ShapeDtypeStruct((Bp, two_L), out_dtype),  # mu || logvar (split below)
        jax.ShapeDtypeStruct((Bp, 2), out_dtype),      # yd_pred
        jax.ShapeDtypeStruct((Bp, 1), out_dtype),      # t_pred (squeezed by wrapper)
    )
    out_specs = (
        pl.BlockSpec((block_b, two_L), lambda i: (i, 0)),
        pl.BlockSpec((block_b, 2), lambda i: (i, 0)),
        pl.BlockSpec((block_b, 1), lambda i: (i, 0)),
    )

    # Advisory cost estimate so XLA can schedule surrounding ops around this call.
    flops_per_row = 2 * (3 * h * h + h                 # fc_t
                         + d * h + 2 * h * h + h       # fc_shared (+rank-1)
                         + 3 * h * h + h + 2 * h       # fc_yd (+rank-1, head)
                         + h * two_L + 3 * two_L)      # fused mu/logvar head
    param_bytes = sum(int(p.size) * p.dtype.itemsize for p in weight_list)
    cost = pl.CostEstimate(
        flops=int(flops_per_row) * int(Bp),
        transcendentals=9 * h * int(Bp),
        bytes_accessed=int(param_bytes + (Bp * d + Bp * (two_L + 3)) * 4),
    )

    mulv, yd_pred, t_pred = pl.pallas_call(
        _cevae_encoder_kernel,
        out_shape=out_shape,
        grid_spec=pltpu.PrefetchScalarGridSpec(
            num_scalar_prefetch=0,
            grid=grid,
            in_specs=in_specs,
            out_specs=out_specs,
        ),
        compiler_params=pltpu.CompilerParams(
            dimension_semantics=("parallel",),   # batch tiles independent (v7x 2 TCs)
        ),
        cost_estimate=cost,
    )(x, *weight_list)

    if Bp != B:
        mulv, yd_pred, t_pred = (a[:B] for a in (mulv, yd_pred, t_pred))
    mu, logvar = mulv[:, :L], mulv[:, L:]
    return mu, logvar, yd_pred, t_pred[:, 0]   # t_pred.squeeze()


def cevae_encoder_ref(x, params):
    """Pure-JAX reference matching the PyTorch forward (t_gt=None, dropout=0)."""
    p = params
    x = x.astype(jnp.float32)
    h = _elu(x @ p["t_w0"] + p["t_b0"])
    h = _elu(h @ p["t_w1"] + p["t_b1"])
    h = _elu(h @ p["t_w2"] + p["t_b2"])
    t_pred = h @ p["t_w3"].T + p["t_b3"]
    t_embed = t_pred @ p["te_w"] + p["te_b"]
    w0 = jnp.concatenate([p["s_w0x"], p["s_w0t"]], axis=0)
    h = _elu(jnp.concatenate([x, t_embed], axis=1) @ w0 + p["s_b0"])
    h = _elu(h @ p["s_w1"] + p["s_b1"])
    h_shared = _elu(h @ p["s_w2"] + p["s_b2"])
    wy0 = jnp.concatenate([p["yd_w0h"], p["yd_w0t"]], axis=0)
    h = _elu(jnp.concatenate([h_shared, t_embed], axis=1) @ wy0 + p["yd_b0"])
    h = _elu(h @ p["yd_w1"] + p["yd_b1"])
    h = _elu(h @ p["yd_w2"] + p["yd_b2"])
    yd_pred = h @ p["yd_w3"].T + p["yd_b3"]
    yd_embed = yd_pred @ p["ye_w"] + p["ye_b"]
    h_tyd = jnp.concatenate([h_shared, t_embed, yd_embed], axis=1)
    mu = h_tyd @ jnp.concatenate([p["mu_wh"], p["mu_wt"], p["mu_wy"]], axis=0) + p["mu_b"]
    lv = h_tyd @ jnp.concatenate([p["lv_wh"], p["lv_wt"], p["lv_wy"]], axis=0) + p["lv_b"]
    return mu, lv, yd_pred, t_pred[:, 0]


if __name__ == "__main__":
    key = jax.random.PRNGKey(0)
    k_x, k_p = jax.random.split(key)

    # NOTE: the PyTorch module applies fc_t (built on hidden_dim inputs) directly
    # to x, which requires input_dim == hidden_dim; we mirror that constraint.
    B, input_dim, hidden_dim, latent_dim = 8, 32, 32, 16
    x = jax.random.normal(k_x, (B, input_dim), dtype=jnp.float32)
    params = init_cevae_encoder_params(k_p, input_dim, latent_dim, hidden_dim)

    outs = cevae_encoder(x, params)
    mu, logvar, yd_pred, t_pred = jax.block_until_ready(outs)

    assert mu.shape == (B, latent_dim) and logvar.shape == (B, latent_dim)
    assert yd_pred.shape == (B, 2) and t_pred.shape == (B,)

    mu_r, lv_r, yd_r, t_r = cevae_encoder_ref(x, params)
    for got, ref in ((mu, mu_r), (logvar, lv_r), (yd_pred, yd_r), (t_pred, t_r)):
        assert bool(jnp.all(jnp.isfinite(got)))
        assert bool(jnp.allclose(got, ref, rtol=2e-2, atol=2e-2)), \
            float(jnp.max(jnp.abs(got - ref)))

    print("KERNEL_OK")
</pallas_src>

<mosaic_0001>
module attributes {stable_mosaic.version = 11 : i64} {
  func.func @_cevae_encoder_kernel(%arg0: i32, %arg1: memref<8x32xf32, #tpu.memory_space<vmem>>, %arg2: memref<32x32xf32, #tpu.memory_space<vmem>>, %arg3: memref<1x32xf32, #tpu.memory_space<vmem>>, %arg4: memref<32x32xf32, #tpu.memory_space<vmem>>, %arg5: memref<1x32xf32, #tpu.memory_space<vmem>>, %arg6: memref<32x32xf32, #tpu.memory_space<vmem>>, %arg7: memref<1x32xf32, #tpu.memory_space<vmem>>, %arg8: memref<1x32xf32, #tpu.memory_space<vmem>>, %arg9: memref<1x1xf32, #tpu.memory_space<vmem>>, %arg10: memref<32x32xf32, #tpu.memory_space<vmem>>, %arg11: memref<1x32xf32, #tpu.memory_space<vmem>>, %arg12: memref<1x32xf32, #tpu.memory_space<vmem>>, %arg13: memref<32x32xf32, #tpu.memory_space<vmem>>, %arg14: memref<1x32xf32, #tpu.memory_space<vmem>>, %arg15: memref<32x32xf32, #tpu.memory_space<vmem>>, %arg16: memref<1x32xf32, #tpu.memory_space<vmem>>, %arg17: memref<32x32xf32, #tpu.memory_space<vmem>>, %arg18: memref<1x32xf32, #tpu.memory_space<vmem>>, %arg19: memref<1x32xf32, #tpu.memory_space<vmem>>, %arg20: memref<32x32xf32, #tpu.memory_space<vmem>>, %arg21: memref<1x32xf32, #tpu.memory_space<vmem>>, %arg22: memref<32x32xf32, #tpu.memory_space<vmem>>, %arg23: memref<1x32xf32, #tpu.memory_space<vmem>>, %arg24: memref<2x32xf32, #tpu.memory_space<vmem>>, %arg25: memref<1x2xf32, #tpu.memory_space<vmem>>, %arg26: memref<32x32xf32, #tpu.memory_space<vmem>>, %arg27: memref<1x32xf32, #tpu.memory_space<vmem>>, %arg28: memref<2x32xf32, #tpu.memory_space<vmem>>, %arg29: memref<1x32xf32, #tpu.memory_space<vmem>>, %arg30: memref<8x32xf32, #tpu.memory_space<vmem>>, %arg31: memref<8x2xf32, #tpu.memory_space<vmem>>, %arg32: memref<8x1xf32, #tpu.memory_space<vmem>>) attributes {dimension_semantics = [#tpu.dimension_semantics<parallel>], iteration_bounds = array<i64: 1>, scalar_prefetch = 0 : i64, scratch_operands = 0 : i64, tpu.core_type = #tpu.core_type<tc>, window_params = [{transform_indices = @transform_0, window_bounds = array<i64: 8, 32>}, {pipeline_mode = #tpu.pipeline_mode<synchronous>, transform_indices = @transform_1, window_bounds = array<i64: 32, 32>}, {pipeline_mode = #tpu.pipeline_mode<synchronous>, transform_indices = @transform_2, window_bounds = array<i64: 1, 32>}, {pipeline_mode = #tpu.pipeline_mode<synchronous>, transform_indices = @transform_3, window_bounds = array<i64: 32, 32>}, {pipeline_mode = #tpu.pipeline_mode<synchronous>, transform_indices = @transform_4, window_bounds = array<i64: 1, 32>}, {pipeline_mode = #tpu.pipeline_mode<synchronous>, transform_indices = @transform_5, window_bounds = array<i64: 32, 32>}, {pipeline_mode = #tpu.pipeline_mode<synchronous>, transform_indices = @transform_6, window_bounds = array<i64: 1, 32>}, {pipeline_mode = #tpu.pipeline_mode<synchronous>, transform_indices = @transform_7, window_bounds = array<i64: 1, 32>}, {pipeline_mode = #tpu.pipeline_mode<synchronous>, transform_indices = @transform_8, window_bounds = array<i64: 1, 1>}, {pipeline_mode = #tpu.pipeline_mode<synchronous>, transform_indices = @transform_9, window_bounds = array<i64: 32, 32>}, {pipeline_mode = #tpu.pipeline_mode<synchronous>, transform_indices = @transform_10, window_bounds = array<i64: 1, 32>}, {pipeline_mode = #tpu.pipeline_mode<synchronous>, transform_indices = @transform_11, window_bounds = array<i64: 1, 32>}, {pipeline_mode = #tpu.pipeline_mode<synchronous>, transform_indices = @transform_12, window_bounds = array<i64: 32, 32>}, {pipeline_mode = #tpu.pipeline_mode<synchronous>, transform_indices = @transform_13, window_bounds = array<i64: 1, 32>}, {pipeline_mode = #tpu.pipeline_mode<synchronous>, transform_indices = @transform_14, window_bounds = array<i64: 32, 32>}, {pipeline_mode = #tpu.pipeline_mode<synchronous>, transform_indices = @transform_15, window_bounds = array<i64: 1, 32>}, {pipeline_mode = #tpu.pipeline_mode<synchronous>, transform_indices = @transform_16, window_bounds = array<i64: 32, 32>}, {pipeline_mode = #tpu.pipeline_mode<synchronous>, transform_indices = @transform_17, window_bounds = array<i64: 1, 32>}, {pipeline_mode = #tpu.pipeline_mode<synchronous>, transform_indices = @transform_18, window_bounds = array<i64: 1, 32>}, {pipeline_mode = #tpu.pipeline_mode<synchronous>, transform_indices = @transform_19, window_bounds = array<i64: 32, 32>}, {pipeline_mode = #tpu.pipeline_mode<synchronous>, transform_indices = @transform_20, window_bounds = array<i64: 1, 32>}, {pipeline_mode = #tpu.pipeline_mode<synchronous>, transform_indices = @transform_21, window_bounds = array<i64: 32, 32>}, {pipeline_mode = #tpu.pipeline_mode<synchronous>, transform_indices = @transform_22, window_bounds = array<i64: 1, 32>}, {pipeline_mode = #tpu.pipeline_mode<synchronous>, transform_indices = @transform_23, window_bounds = array<i64: 2, 32>}, {pipeline_mode = #tpu.pipeline_mode<synchronous>, transform_indices = @transform_24, window_bounds = array<i64: 1, 2>}, {pipeline_mode = #tpu.pipeline_mode<synchronous>, transform_indices = @transform_25, window_bounds = array<i64: 32, 32>}, {pipeline_mode = #tpu.pipeline_mode<synchronous>, transform_indices = @transform_26, window_bounds = array<i64: 1, 32>}, {pipeline_mode = #tpu.pipeline_mode<synchronous>, transform_indices = @transform_27, window_bounds = array<i64: 2, 32>}, {pipeline_mode = #tpu.pipeline_mode<synchronous>, transform_indices = @transform_28, window_bounds = array<i64: 1, 32>}, {transform_indices = @transform_29, window_bounds = array<i64: 8, 32>}, {transform_indices = @transform_30, window_bounds = array<i64: 8, 2>}, {transform_indices = @transform_31, window_bounds = array<i64: 8, 1>}]} {
    %c0 = arith.constant 0 : index
    %c0_0 = arith.constant 0 : index
    %0 = vector.load %arg1[%c0, %c0_0] : memref<8x32xf32, #tpu.memory_space<vmem>>, vector<8x32xf32>
    %c0_1 = arith.constant 0 : index
    %c0_2 = arith.constant 0 : index
    %1 = vector.load %arg2[%c0_1, %c0_2] : memref<32x32xf32, #tpu.memory_space<vmem>>, vector<32x32xf32>
    %cst = arith.constant dense<0.000000e+00> : vector<8x32xf32>
    %2 = tpu.matmul %0, %1, %cst {dimension_numbers = #tpu.dot_dimension_numbers<[1], [0], [0], [1], [0, 0, 1, 1], [], []>} : vector<8x32xf32>, vector<32x32xf32>, vector<8x32xf32> -> vector<8x32xf32>
    %c0_3 = arith.constant 0 : index
    %c0_4 = arith.constant 0 : index
    %3 = vector.load %arg3[%c0_3, %c0_4] : memref<1x32xf32, #tpu.memory_space<vmem>>, vector<1x32xf32>
    %4 = vector.broadcast %3 : vector<1x32xf32> to vector<8x32xf32>
    %5 = arith.addf %2, %4 : vector<8x32xf32>
    %cst_5 = arith.constant 0.000000e+00 : f32
    %6 = vector.broadcast %cst_5 : f32 to vector<8x32xf32>
    %7 = arith.cmpf ogt, %5, %6 : vector<8x32xf32>
    %8 = math.exp %5 : vector<8x32xf32>
    %cst_6 = arith.constant 1.000000e+00 : f32
    %9 = vector.broadcast %cst_6 : f32 to vector<8x32xf32>
    %10 = arith.subf %8, %9 : vector<8x32xf32>
    %11 = arith.select %7, %5, %10 : vector<8x32xi1>, vector<8x32xf32>
    %c0_7 = arith.constant 0 : index
    %c0_8 = arith.constant 0 : index
    %12 = vector.load %arg4[%c0_7, %c0_8] : memref<32x32xf32, #tpu.memory_space<vmem>>, vector<32x32xf32>
    %cst_9 = arith.constant dense<0.000000e+00> : vector<8x32xf32>
    %13 = tpu.matmul %11, %12, %cst_9 {dimension_numbers = #tpu.dot_dimension_numbers<[1], [0], [0], [1], [0, 0, 1, 1], [], []>} : vector<8x32xf32>, vector<32x32xf32>, vector<8x32xf32> -> vector<8x32xf32>
    %c0_10 = arith.constant 0 : index
    %c0_11 = arith.constant 0 : index
    %14 = vector.load %arg5[%c0_10, %c0_11] : memref<1x32xf32, #tpu.memory_space<vmem>>, vector<1x32xf32>
    %15 = vector.broadcast %14 : vector<1x32xf32> to vector<8x32xf32>
    %16 = arith.addf %13, %15 : vector<8x32xf32>
    %cst_12 = arith.constant 0.000000e+00 : f32
    %17 = vector.broadcast %cst_12 : f32 to vector<8x32xf32>
    %18 = arith.cmpf ogt, %16, %17 : vector<8x32xf32>
    %19 = math.exp %16 : vector<8x32xf32>
    %cst_13 = arith.constant 1.000000e+00 : f32
    %20 = vector.broadcast %cst_13 : f32 to vector<8x32xf32>
    %21 = arith.subf %19, %20 : vector<8x32xf32>
    %22 = arith.select %18, %16, %21 : vector<8x32xi1>, vector<8x32xf32>
    %c0_14 = arith.constant 0 : index
    %c0_15 = arith.constant 0 : index
    %23 = vector.load %arg6[%c0_14, %c0_15] : memref<32x32xf32, #tpu.memory_space<vmem>>, vector<32x32xf32>
    %cst_16 = arith.constant dense<0.000000e+00> : vector<8x32xf32>
    %24 = tpu.matmul %22, %23, %cst_16 {dimension_numbers = #tpu.dot_dimension_numbers<[1], [0], [0], [1], [0, 0, 1, 1], [], []>} : vector<8x32xf32>, vector<32x32xf32>, vector<8x32xf32> -> vector<8x32xf32>
    %c0_17 = arith.constant 0 : index
    %c0_18 = arith.constant 0 : index
    %25 = vector.load %arg7[%c0_17, %c0_18] : memref<1x32xf32, #tpu.memory_space<vmem>>, vector<1x32xf32>
    %26 = vector.broadcast %25 : vector<1x32xf32> to vector<8x32xf32>
    %27 = arith.addf %24, %26 : vector<8x32xf32>
    %cst_19 = arith.constant 0.000000e+00 : f32
    %28 = vector.broadcast %cst_19 : f32 to vector<8x32xf32>
    %29 = arith.cmpf ogt, %27, %28 : vector<8x32xf32>
    %30 = math.exp %27 : vector<8x32xf32>
    %cst_20 = arith.constant 1.000000e+00 : f32
    %31 = vector.broadcast %cst_20 : f32 to vector<8x32xf32>
    %32 = arith.subf %30, %31 : vector<8x32xf32>
    %33 = arith.select %29, %27, %32 : vector<8x32xi1>, vector<8x32xf32>
    %c0_21 = arith.constant 0 : index
    %c0_22 = arith.constant 0 : index
    %34 = vector.load %arg8[%c0_21, %c0_22] : memref<1x32xf32, #tpu.memory_space<vmem>>, vector<1x32xf32>
    %35 = vector.broadcast %34 : vector<1x32xf32> to vector<8x32xf32>
    %36 = arith.mulf %33, %35 : vector<8x32xf32>
    %cst_23 = arith.constant dense<0.000000e+00> : vector<8xf32>
    %37 = vector.multi_reduction <add>, %36, %cst_23 [1] : vector<8x32xf32> to vector<8xf32>
    %38 = vector.shape_cast %37 : vector<8xf32> to vector<8x1xf32>
    %c0_24 = arith.constant 0 : index
    %c0_25 = arith.constant 0 : index
    %39 = vector.load %arg9[%c0_24, %c0_25] : memref<1x1xf32, #tpu.memory_space<vmem>>, vector<1x1xf32>
    %40 = vector.broadcast %39 : vector<1x1xf32> to vector<8x1xf32>
    %41 = arith.addf %38, %40 : vector<8x1xf32>
    %c0_26 = arith.constant 0 : index
    %c0_27 = arith.constant 0 : index
    %42 = vector.load %arg10[%c0_26, %c0_27] : memref<32x32xf32, #tpu.memory_space<vmem>>, vector<32x32xf32>
    %cst_28 = arith.constant dense<0.000000e+00> : vector<8x32xf32>
    %43 = tpu.matmul %0, %42, %cst_28 {dimension_numbers = #tpu.dot_dimension_numbers<[1], [0], [0], [1], [0, 0, 1, 1], [], []>} : vector<8x32xf32>, vector<32x32xf32>, vector<8x32xf32> -> vector<8x32xf32>
    %c0_29 = arith.constant 0 : index
    %c0_30 = arith.constant 0 : index
    %44 = vector.load %arg11[%c0_29, %c0_30] : memref<1x32xf32, #tpu.memory_space<vmem>>, vector<1x32xf32>
    %45 = vector.broadcast %41 : vector<8x1xf32> to vector<8x32xf32>
    %46 = vector.broadcast %44 : vector<1x32xf32> to vector<8x32xf32>
    %47 = arith.mulf %45, %46 : vector<8x32xf32>
    %48 = arith.addf %43, %47 : vector<8x32xf32>
    %c0_31 = arith.constant 0 : index
    %c0_32 = arith.constant 0 : index
    %49 = vector.load %arg12[%c0_31, %c0_32] : memref<1x32xf32, #tpu.memory_space<vmem>>, vector<1x32xf32>
    %50 = vector.broadcast %49 : vector<1x32xf32> to vector<8x32xf32>
    %51 = arith.addf %48, %50 : vector<8x32xf32>
    %cst_33 = arith.constant 0.000000e+00 : f32
    %52 = vector.broadcast %cst_33 : f32 to vector<8x32xf32>
    %53 = arith.cmpf ogt, %51, %52 : vector<8x32xf32>
    %54 = math.exp %51 : vector<8x32xf32>
    %cst_34 = arith.constant 1.000000e+00 : f32
    %55 = vector.broadcast %cst_34 : f32 to vector<8x32xf32>
    %56 = arith.subf %54, %55 : vector<8x32xf32>
    %57 = arith.select %53, %51, %56 : vector<8x32xi1>, vector<8x32xf32>
    %c0_35 = arith.constant 0 : index
    %c0_36 = arith.constant 0 : index
    %58 = vector.load %arg13[%c0_35, %c0_36] : memref<32x32xf32, #tpu.memory_space<vmem>>, vector<32x32xf32>
    %cst_37 = arith.constant dense<0.000000e+00> : vector<8x32xf32>
    %59 = tpu.matmul %57, %58, %cst_37 {dimension_numbers = #tpu.dot_dimension_numbers<[1], [0], [0], [1], [0, 0, 1, 1], [], []>} : vector<8x32xf32>, vector<32x32xf32>, vector<8x32xf32> -> vector<8x32xf32>
    %c0_38 = arith.constant 0 : index
    %c0_39 = arith.constant 0 : index
    %60 = vector.load %arg14[%c0_38, %c0_39] : memref<1x32xf32, #tpu.memory_space<vmem>>, vector<1x32xf32>
    %61 = vector.broadcast %60 : vector<1x32xf32> to vector<8x32xf32>
    %62 = arith.addf %59, %61 : vector<8x32xf32>
    %cst_40 = arith.constant 0.000000e+00 : f32
    %63 = vector.broadcast %cst_40 : f32 to vector<8x32xf32>
    %64 = arith.cmpf ogt, %62, %63 : vector<8x32xf32>
    %65 = math.exp %62 : vector<8x32xf32>
    %cst_41 = arith.constant 1.000000e+00 : f32
    %66 = vector.broadcast %cst_41 : f32 to vector<8x32xf32>
    %67 = arith.subf %65, %66 : vector<8x32xf32>
    %68 = arith.select %64, %62, %67 : vector<8x32xi1>, vector<8x32xf32>
    %c0_42 = arith.constant 0 : index
    %c0_43 = arith.constant 0 : index
    %69 = vector.load %arg15[%c0_42, %c0_43] : memref<32x32xf32, #tpu.memory_space<vmem>>, vector<32x32xf32>
    %cst_44 = arith.constant dense<0.000000e+00> : vector<8x32xf32>
    %70 = tpu.matmul %68, %69, %cst_44 {dimension_numbers = #tpu.dot_dimension_numbers<[1], [0], [0], [1], [0, 0, 1, 1], [], []>} : vector<8x32xf32>, vector<32x32xf32>, vector<8x32xf32> -> vector<8x32xf32>
    %c0_45 = arith.constant 0 : index
    %c0_46 = arith.constant 0 : index
    %71 = vector.load %arg16[%c0_45, %c0_46] : memref<1x32xf32, #tpu.memory_space<vmem>>, vector<1x32xf32>
    %72 = vector.broadcast %71 : vector<1x32xf32> to vector<8x32xf32>
    %73 = arith.addf %70, %72 : vector<8x32xf32>
    %cst_47 = arith.constant 0.000000e+00 : f32
    %74 = vector.broadcast %cst_47 : f32 to vector<8x32xf32>
    %75 = arith.cmpf ogt, %73, %74 : vector<8x32xf32>
    %76 = math.exp %73 : vector<8x32xf32>
    %cst_48 = arith.constant 1.000000e+00 : f32
    %77 = vector.broadcast %cst_48 : f32 to vector<8x32xf32>
    %78 = arith.subf %76, %77 : vector<8x32xf32>
    %79 = arith.select %75, %73, %78 : vector<8x32xi1>, vector<8x32xf32>
    %c0_49 = arith.constant 0 : index
    %c0_50 = arith.constant 0 : index
    %80 = vector.load %arg17[%c0_49, %c0_50] : memref<32x32xf32, #tpu.memory_space<vmem>>, vector<32x32xf32>
    %cst_51 = arith.constant dense<0.000000e+00> : vector<8x32xf32>
    %81 = tpu.matmul %79, %80, %cst_51 {dimension_numbers = #tpu.dot_dimension_numbers<[1], [0], [0], [1], [0, 0, 1, 1], [], []>} : vector<8x32xf32>, vector<32x32xf32>, vector<8x32xf32> -> vector<8x32xf32>
    %c0_52 = arith.constant 0 : index
    %c0_53 = arith.constant 0 : index
    %82 = vector.load %arg18[%c0_52, %c0_53] : memref<1x32xf32, #tpu.memory_space<vmem>>, vector<1x32xf32>
    %83 = vector.broadcast %41 : vector<8x1xf32> to vector<8x32xf32>
    %84 = vector.broadcast %82 : vector<1x32xf32> to vector<8x32xf32>
    %85 = arith.mulf %83, %84 : vector<8x32xf32>
    %86 = arith.addf %81, %85 : vector<8x32xf32>
    %c0_54 = arith.constant 0 : index
    %c0_55 = arith.constant 0 : index
    %87 = vector.load %arg19[%c0_54, %c0_55] : memref<1x32xf32, #tpu.memory_space<vmem>>, vector<1x32xf32>
    %88 = vector.broadcast %87 : vector<1x32xf32> to vector<8x32xf32>
    %89 = arith.addf %86, %88 : vector<8x32xf32>
    %cst_56 = arith.constant 0.000000e+00 : f32
    %90 = vector.broadcast %cst_56 : f32 to vector<8x32xf32>
    %91 = arith.cmpf ogt, %89, %90 : vector<8x32xf32>
    %92 = math.exp %89 : vector<8x32xf32>
    %cst_57 = arith.constant 1.000000e+00 : f32
    %93 = vector.broadcast %cst_57 : f32 to vector<8x32xf32>
    %94 = arith.subf %92, %93 : vector<8x32xf32>
    %95 = arith.select %91, %89, %94 : vector<8x32xi1>, vector<8x32xf32>
    %c0_58 = arith.constant 0 : index
    %c0_59 = arith.constant 0 : index
    %96 = vector.load %arg20[%c0_58, %c0_59] : memref<32x32xf32, #tpu.memory_space<vmem>>, vector<32x32xf32>
    %cst_60 = arith.constant dense<0.000000e+00> : vector<8x32xf32>
    %97 = tpu.matmul %95, %96, %cst_60 {dimension_numbers = #tpu.dot_dimension_numbers<[1], [0], [0], [1], [0, 0, 1, 1], [], []>} : vector<8x32xf32>, vector<32x32xf32>, vector<8x32xf32> -> vector<8x32xf32>
    %c0_61 = arith.constant 0 : index
    %c0_62 = arith.constant 0 : index
    %98 = vector.load %arg21[%c0_61, %c0_62] : memref<1x32xf32, #tpu.memory_space<vmem>>, vector<1x32xf32>
    %99 = vector.broadcast %98 : vector<1x32xf32> to vector<8x32xf32>
    %100 = arith.addf %97, %99 : vector<8x32xf32>
    %cst_63 = arith.constant 0.000000e+00 : f32
    %101 = vector.broadcast %cst_63 : f32 to vector<8x32xf32>
    %102 = arith.cmpf ogt, %100, %101 : vector<8x32xf32>
    %103 = math.exp %100 : vector<8x32xf32>
    %cst_64 = arith.constant 1.000000e+00 : f32
    %104 = vector.broadcast %cst_64 : f32 to vector<8x32xf32>
    %105 = arith.subf %103, %104 : vector<8x32xf32>
    %106 = arith.select %102, %100, %105 : vector<8x32xi1>, vector<8x32xf32>
    %c0_65 = arith.constant 0 : index
    %c0_66 = arith.constant 0 : index
    %107 = vector.load %arg22[%c0_65, %c0_66] : memref<32x32xf32, #tpu.memory_space<vmem>>, vector<32x32xf32>
    %cst_67 = arith.constant dense<0.000000e+00> : vector<8x32xf32>
    %108 = tpu.matmul %106, %107, %cst_67 {dimension_numbers = #tpu.dot_dimension_numbers<[1], [0], [0], [1], [0, 0, 1, 1], [], []>} : vector<8x32xf32>, vector<32x32xf32>, vector<8x32xf32> -> vector<8x32xf32>
    %c0_68 = arith.constant 0 : index
    %c0_69 = arith.constant 0 : index
    %109 = vector.load %arg23[%c0_68, %c0_69] : memref<1x32xf32, #tpu.memory_space<vmem>>, vector<1x32xf32>
    %110 = vector.broadcast %109 : vector<1x32xf32> to vector<8x32xf32>
    %111 = arith.addf %108, %110 : vector<8x32xf32>
    %cst_70 = arith.constant 0.000000e+00 : f32
    %112 = vector.broadcast %cst_70 : f32 to vector<8x32xf32>
    %113 = arith.cmpf ogt, %111, %112 : vector<8x32xf32>
    %114 = math.exp %111 : vector<8x32xf32>
    %cst_71 = arith.constant 1.000000e+00 : f32
    %115 = vector.broadcast %cst_71 : f32 to vector<8x32xf32>
    %116 = arith.subf %114, %115 : vector<8x32xf32>
    %117 = arith.select %113, %111, %116 : vector<8x32xi1>, vector<8x32xf32>
    %c0_72 = arith.constant 0 : index
    %c0_73 = arith.constant 0 : index
    %118 = vector.load %arg24[%c0_72, %c0_73] : memref<2x32xf32, #tpu.memory_space<vmem>>, vector<1x32xf32>
    %119 = vector.broadcast %118 : vector<1x32xf32> to vector<8x32xf32>
    %120 = arith.mulf %117, %119 : vector<8x32xf32>
    %cst_74 = arith.constant dense<0.000000e+00> : vector<8xf32>
    %121 = vector.multi_reduction <add>, %120, %cst_74 [1] : vector<8x32xf32> to vector<8xf32>
    %122 = vector.shape_cast %121 : vector<8xf32> to vector<8x1xf32>
    %c0_75 = arith.constant 0 : index
    %c0_76 = arith.constant 0 : index
    %123 = vector.load %arg25[%c0_75, %c0_76] : memref<1x2xf32, #tpu.memory_space<vmem>>, vector<1x1xf32>
    %124 = vector.broadcast %123 : vector<1x1xf32> to vector<8x1xf32>
    %125 = arith.addf %122, %124 : vector<8x1xf32>
    %c1 = arith.constant 1 : index
    %c0_77 = arith.constant 0 : index
    %126 = vector.load %arg24[%c1, %c0_77] : memref<2x32xf32, #tpu.memory_space<vmem>>, vector<1x32xf32>
    %127 = vector.broadcast %126 : vector<1x32xf32> to vector<8x32xf32>
    %128 = arith.mulf %117, %127 : vector<8x32xf32>
    %cst_78 = arith.constant dense<0.000000e+00> : vector<8xf32>
    %129 = vector.multi_reduction <add>, %128, %cst_78 [1] : vector<8x32xf32> to vector<8xf32>
    %130 = vector.shape_cast %129 : vector<8xf32> to vector<8x1xf32>
    %c0_79 = arith.constant 0 : index
    %c1_80 = arith.constant 1 : index
    %131 = vector.load %arg25[%c0_79, %c1_80] : memref<1x2xf32, #tpu.memory_space<vmem>>, vector<1x1xf32>
    %132 = vector.broadcast %131 : vector<1x1xf32> to vector<8x1xf32>
    %133 = arith.addf %130, %132 : vector<8x1xf32>
    %c0_81 = arith.constant 0 : index
    %c0_82 = arith.constant 0 : index
    %134 = vector.load %arg26[%c0_81, %c0_82] : memref<32x32xf32, #tpu.memory_space<vmem>>, vector<32x32xf32>
    %cst_83 = arith.constant dense<0.000000e+00> : vector<8x32xf32>
    %135 = tpu.matmul %79, %134, %cst_83 {dimension_numbers = #tpu.dot_dimension_numbers<[1], [0], [0], [1], [0, 0, 1, 1], [], []>} : vector<8x32xf32>, vector<32x32xf32>, vector<8x32xf32> -> vector<8x32xf32>
    %c0_84 = arith.constant 0 : index
    %c0_85 = arith.constant 0 : index
    %136 = vector.load %arg27[%c0_84, %c0_85] : memref<1x32xf32, #tpu.memory_space<vmem>>, vector<1x32xf32>
    %137 = vector.broadcast %41 : vector<8x1xf32> to vector<8x32xf32>
    %138 = vector.broadcast %136 : vector<1x32xf32> to vector<8x32xf32>
    %139 = arith.mulf %137, %138 : vector<8x32xf32>
    %140 = arith.addf %135, %139 : vector<8x32xf32>
    %c0_86 = arith.constant 0 : index
    %c0_87 = arith.constant 0 : index
    %141 = vector.load %arg28[%c0_86, %c0_87] : memref<2x32xf32, #tpu.memory_space<vmem>>, vector<1x32xf32>
    %142 = vector.broadcast %125 : vector<8x1xf32> to vector<8x32xf32>
    %143 = vector.broadcast %141 : vector<1x32xf32> to vector<8x32xf32>
    %144 = arith.mulf %142, %143 : vector<8x32xf32>
    %145 = arith.addf %140, %144 : vector<8x32xf32>
    %c1_88 = arith.constant 1 : index
    %c0_89 = arith.constant 0 : index
    %146 = vector.load %arg28[%c1_88, %c0_89] : memref<2x32xf32, #tpu.memory_space<vmem>>, vector<1x32xf32>
    %147 = vector.broadcast %133 : vector<8x1xf32> to vector<8x32xf32>
    %148 = vector.broadcast %146 : vector<1x32xf32> to vector<8x32xf32>
    %149 = arith.mulf %147, %148 : vector<8x32xf32>
    %150 = arith.addf %145, %149 : vector<8x32xf32>
    %c0_90 = arith.constant 0 : index
    %c0_91 = arith.constant 0 : index
    %151 = vector.load %arg29[%c0_90, %c0_91] : memref<1x32xf32, #tpu.memory_space<vmem>>, vector<1x32xf32>
    %152 = vector.broadcast %151 : vector<1x32xf32> to vector<8x32xf32>
    %153 = arith.addf %150, %152 : vector<8x32xf32>
    %c0_92 = arith.constant 0 : index
    %c0_93 = arith.constant 0 : index
    %154 = vector.load %arg30[%c0_92, %c0_93] : memref<8x32xf32, #tpu.memory_space<vmem>>, vector<8x32xf32>
    tpu.vector_store %arg30[%c0_92, %c0_93], %153 {strides = array<i32>} : memref<8x32xf32, #tpu.memory_space<vmem>>, vector<8x32xf32>,
    %c0_94 = arith.constant 0 : index
    %c0_95 = arith.constant 0 : index
    %155 = vector.load %arg31[%c0_94, %c0_95] : memref<8x2xf32, #tpu.memory_space<vmem>>, vector<8x1xf32>
    tpu.vector_store %arg31[%c0_94, %c0_95], %125 {strides = array<i32>} : memref<8x2xf32, #tpu.memory_space<vmem>>, vector<8x1xf32>,
    %c0_96 = arith.constant 0 : index
    %c1_97 = arith.constant 1 : index
    %156 = vector.load %arg31[%c0_96, %c1_97] : memref<8x2xf32, #tpu.memory_space<vmem>>, vector<8x1xf32>
    tpu.vector_store %arg31[%c0_96, %c1_97], %133 {strides = array<i32>} : memref<8x2xf32, #tpu.memory_space<vmem>>, vector<8x1xf32>,
    %c0_98 = arith.constant 0 : index
    %c0_99 = arith.constant 0 : index
    %157 = vector.load %arg32[%c0_98, %c0_99] : memref<8x1xf32, #tpu.memory_space<vmem>>, vector<8x1xf32>
    tpu.vector_store %arg32[%c0_98, %c0_99], %41 {strides = array<i32>} : memref<8x1xf32, #tpu.memory_space<vmem>>, vector<8x1xf32>,
    return
  }
  func.func @transform_0(%arg0: i32) -> (i32, i32) {
    %c0_i32 = arith.constant 0 : i32
    %c0_i32_0 = arith.constant 0 : i32
    return %arg0, %c0_i32 : i32, i32
  }
  func.func @transform_1(%arg0: i32) -> (i32, i32) {
    %c0_i32 = arith.constant 0 : i32
    %c0_i32_0 = arith.constant 0 : i32
    %c0_i32_1 = arith.constant 0 : i32
    return %c0_i32, %c0_i32_0 : i32, i32
  }
  func.func @transform_2(%arg0: i32) -> (i32, i32) {
    %c0_i32 = arith.constant 0 : i32
    %c0_i32_0 = arith.constant 0 : i32
    %c0_i32_1 = arith.constant 0 : i32
    return %c0_i32, %c0_i32_0 : i32, i32
  }
  func.func @transform_3(%arg0: i32) -> (i32, i32) {
    %c0_i32 = arith.constant 0 : i32
    %c0_i32_0 = arith.constant 0 : i32
    %c0_i32_1 = arith.constant 0 : i32
    return %c0_i32, %c0_i32_0 : i32, i32
  }
  func.func @transform_4(%arg0: i32) -> (i32, i32) {
    %c0_i32 = arith.constant 0 : i32
    %c0_i32_0 = arith.constant 0 : i32
    %c0_i32_1 = arith.constant 0 : i32
    return %c0_i32, %c0_i32_0 : i32, i32
  }
  func.func @transform_5(%arg0: i32) -> (i32, i32) {
    %c0_i32 = arith.constant 0 : i32
    %c0_i32_0 = arith.constant 0 : i32
    %c0_i32_1 = arith.constant 0 : i32
    return %c0_i32, %c0_i32_0 : i32, i32
  }
  func.func @transform_6(%arg0: i32) -> (i32, i32) {
    %c0_i32 = arith.constant 0 : i32
    %c0_i32_0 = arith.constant 0 : i32
    %c0_i32_1 = arith.constant 0 : i32
    return %c0_i32, %c0_i32_0 : i32, i32
  }
  func.func @transform_7(%arg0: i32) -> (i32, i32) {
    %c0_i32 = arith.constant 0 : i32
    %c0_i32_0 = arith.constant 0 : i32
    %c0_i32_1 = arith.constant 0 : i32
    return %c0_i32, %c0_i32_0 : i32, i32
  }
  func.func @transform_8(%arg0: i32) -> (i32, i32) {
    %c0_i32 = arith.constant 0 : i32
    %c0_i32_0 = arith.constant 0 : i32
    %c0_i32_1 = arith.constant 0 : i32
    return %c0_i32, %c0_i32_0 : i32, i32
  }
  func.func @transform_9(%arg0: i32) -> (i32, i32) {
    %c0_i32 = arith.constant 0 : i32
    %c0_i32_0 = arith.constant 0 : i32
    %c0_i32_1 = arith.constant 0 : i32
    return %c0_i32, %c0_i32_0 : i32, i32
  }
  func.func @transform_10(%arg0: i32) -> (i32, i32) {
    %c0_i32 = arith.constant 0 : i32
    %c0_i32_0 = arith.constant 0 : i32
    %c0_i32_1 = arith.constant 0 : i32
    return %c0_i32, %c0_i32_0 : i32, i32
  }
  func.func @transform_11(%arg0: i32) -> (i32, i32) {
    %c0_i32 = arith.constant 0 : i32
    %c0_i32_0 = arith.constant 0 : i32
    %c0_i32_1 = arith.constant 0 : i32
    return %c0_i32, %c0_i32_0 : i32, i32
  }
  func.func @transform_12(%arg0: i32) -> (i32, i32) {
    %c0_i32 = arith.constant 0 : i32
    %c0_i32_0 = arith.constant 0 : i32
    %c0_i32_1 = arith.constant 0 : i32
    return %c0_i32, %c0_i32_0 : i32, i32
  }
  func.func @transform_13(%arg0: i32) -> (i32, i32) {
    %c0_i32 = arith.constant 0 : i32
    %c0_i32_0 = arith.constant 0 : i32
    %c0_i32_1 = arith.constant 0 : i32
    return %c0_i32, %c0_i32_0 : i32, i32
  }
  func.func @transform_14(%arg0: i32) -> (i32, i32) {
    %c0_i32 = arith.constant 0 : i32
    %c0_i32_0 = arith.constant 0 : i32
    %c0_i32_1 = arith.constant 0 : i32
    return %c0_i32, %c0_i32_0 : i32, i32
  }
  func.func @transform_15(%arg0: i32) -> (i32, i32) {
    %c0_i32 = arith.constant 0 : i32
    %c0_i32_0 = arith.constant 0 : i32
    %c0_i32_1 = arith.constant 0 : i32
    return %c0_i32, %c0_i32_0 : i32, i32
  }
  func.func @transform_16(%arg0: i32) -> (i32, i32) {
    %c0_i32 = arith.constant 0 : i32
    %c0_i32_0 = arith.constant 0 : i32
    %c0_i32_1 = arith.constant 0 : i32
    return %c0_i32, %c0_i32_0 : i32, i32
  }
  func.func @transform_17(%arg0: i32) -> (i32, i32) {
    %c0_i32 = arith.constant 0 : i32
    %c0_i32_0 = arith.constant 0 : i32
    %c0_i32_1 = arith.constant 0 : i32
    return %c0_i32, %c0_i32_0 : i32, i32
  }
  func.func @transform_18(%arg0: i32) -> (i32, i32) {
    %c0_i32 = arith.constant 0 : i32
    %c0_i32_0 = arith.constant 0 : i32
    %c0_i32_1 = arith.constant 0 : i32
    return %c0_i32, %c0_i32_0 : i32, i32
  }
  func.func @transform_19(%arg0: i32) -> (i32, i32) {
    %c0_i32 = arith.constant 0 : i32
    %c0_i32_0 = arith.constant 0 : i32
    %c0_i32_1 = arith.constant 0 : i32
    return %c0_i32, %c0_i32_0 : i32, i32
  }
  func.func @transform_20(%arg0: i32) -> (i32, i32) {
    %c0_i32 = arith.constant 0 : i32
    %c0_i32_0 = arith.constant 0 : i32
    %c0_i32_1 = arith.constant 0 : i32
    return %c0_i32, %c0_i32_0 : i32, i32
  }
  func.func @transform_21(%arg0: i32) -> (i32, i32) {
    %c0_i32 = arith.constant 0 : i32
    %c0_i32_0 = arith.constant 0 : i32
    %c0_i32_1 = arith.constant 0 : i32
    return %c0_i32, %c0_i32_0 : i32, i32
  }
  func.func @transform_22(%arg0: i32) -> (i32, i32) {
    %c0_i32 = arith.constant 0 : i32
    %c0_i32_0 = arith.constant 0 : i32
    %c0_i32_1 = arith.constant 0 : i32
    return %c0_i32, %c0_i32_0 : i32, i32
  }
  func.func @transform_23(%arg0: i32) -> (i32, i32) {
    %c0_i32 = arith.constant 0 : i32
    %c0_i32_0 = arith.constant 0 : i32
    %c0_i32_1 = arith.constant 0 : i32
    return %c0_i32, %c0_i32_0 : i32, i32
  }
  func.func @transform_24(%arg0: i32) -> (i32, i32) {
    %c0_i32 = arith.constant 0 : i32
    %c0_i32_0 = arith.constant 0 : i32
    %c0_i32_1 = arith.constant 0 : i32
    return %c0_i32, %c0_i32_0 : i32, i32
  }
  func.func @transform_25(%arg0: i32) -> (i32, i32) {
    %c0_i32 = arith.constant 0 : i32
    %c0_i32_0 = arith.constant 0 : i32
    %c0_i32_1 = arith.constant 0 : i32
    return %c0_i32, %c0_i32_0 : i32, i32
  }
  func.func @transform_26(%arg0: i32) -> (i32, i32) {
    %c0_i32 = arith.constant 0 : i32
    %c0_i32_0 = arith.constant 0 : i32
    %c0_i32_1 = arith.constant 0 : i32
    return %c0_i32, %c0_i32_0 : i32, i32
  }
  func.func @transform_27(%arg0: i32) -> (i32, i32) {
    %c0_i32 = arith.constant 0 : i32
    %c0_i32_0 = arith.constant 0 : i32
    %c0_i32_1 = arith.constant 0 : i32
    return %c0_i32, %c0_i32_0 : i32, i32
  }
  func.func @transform_28(%arg0: i32) -> (i32, i32) {
    %c0_i32 = arith.constant 0 : i32
    %c0_i32_0 = arith.constant 0 : i32
    %c0_i32_1 = arith.constant 0 : i32
    return %c0_i32, %c0_i32_0 : i32, i32
  }
  func.func @transform_29(%arg0: i32) -> (i32, i32) {
    %c0_i32 = arith.constant 0 : i32
    %c0_i32_0 = arith.constant 0 : i32
    return %arg0, %c0_i32 : i32, i32
  }
  func.func @transform_30(%arg0: i32) -> (i32, i32) {
    %c0_i32 = arith.constant 0 : i32
    %c0_i32_0 = arith.constant 0 : i32
    return %arg0, %c0_i32 : i32, i32
  }
  func.func @transform_31(%arg0: i32) -> (i32, i32) {
    %c0_i32 = arith.constant 0 : i32
    %c0_i32_0 = arith.constant 0 : i32
    return %arg0, %c0_i32 : i32, i32
  }
}

</mosaic_0001>

<llo_original>
// kernel: tpu_custom_call.1
$region0: #{tpu_custom_call.1}
  #allocation0 [shape = 'u32[]', space=smem, size = 0x4, offset = 0x4, fixed_abs, tag = 'smem constant byte address 0x4 - core index']
  #allocation1 [shape = 'u32[144,128]{1,0:T(1,128)}', space=vmem, size = 0x12000, scoped, tag = 'internal scratch']
  #allocation2 [shape = 'f32[1,1]{1,0:T(1,128)S(1)}', space=vmem, size = 0x200, scoped, tag = 'scoped memory for tpu_custom_call.1']
  %s0 = inlined_call_operand.smem [shape: u32[32], index: -1, kind: input, shape index: {}]
  %s1 = sld [smem:[%s0]]
  %s2 = scalar_lea.smem %s0, 1
  %s3 = sld [smem:[%s2]]
  %s4 = scalar_lea.smem %s0, 2
  %s5 = sld [smem:[%s4]]
  %s6 = scalar_lea.smem %s0, 3
  %s7 = sld [smem:[%s6]]
  %s8 = scalar_lea.smem %s0, 4
  %s9 = sld [smem:[%s8]]
  %s10 = scalar_lea.smem %s0, 5
  %s11 = sld [smem:[%s10]]
  %s12 = scalar_lea.smem %s0, 6
  %s13 = sld [smem:[%s12]]
  %s14 = scalar_lea.smem %s0, 7
  %s15 = sld [smem:[%s14]]
  %s16 = scalar_lea.smem %s0, 8
  %s17 = sld [smem:[%s16]]
  %s18 = scalar_lea.smem %s0, 9
  %s19 = sld [smem:[%s18]]
  %s20 = scalar_lea.smem %s0, 10
  %s21 = sld [smem:[%s20]]
  %s22 = scalar_lea.smem %s0, 11
  %s23 = sld [smem:[%s22]]
  %s24 = scalar_lea.smem %s0, 12
  %s25 = sld [smem:[%s24]]
  %s26 = scalar_lea.smem %s0, 13
  %s27 = sld [smem:[%s26]]
  %s28 = scalar_lea.smem %s0, 14
  %s29 = sld [smem:[%s28]]
  %s30 = scalar_lea.smem %s0, 15
  %s31 = sld [smem:[%s30]]
  %s32 = scalar_lea.smem %s0, 16
  %s33 = sld [smem:[%s32]]
  %s34 = scalar_lea.smem %s0, 17
  %s35 = sld [smem:[%s34]]
  %s36 = scalar_lea.smem %s0, 18
  %s37 = sld [smem:[%s36]]
  %s38 = scalar_lea.smem %s0, 19
  %s39 = sld [smem:[%s38]]
  %s40 = scalar_lea.smem %s0, 20
  %s41 = sld [smem:[%s40]]
  %s42 = scalar_lea.smem %s0, 21
  %s43 = sld [smem:[%s42]]
  %s44 = scalar_lea.smem %s0, 22
  %s45 = sld [smem:[%s44]]
  %s46 = scalar_lea.smem %s0, 23
  %s47 = sld [smem:[%s46]]
  %s48 = scalar_lea.smem %s0, 24
  %s49 = sld [smem:[%s48]]
  %s50 = scalar_lea.smem %s0, 25
  %s51 = sld [smem:[%s50]]
  %s52 = scalar_lea.smem %s0, 26
  %s53 = sld [smem:[%s52]]
  %s54 = scalar_lea.smem %s0, 27
  %s55 = sld [smem:[%s54]]
  %s56 = scalar_lea.smem %s0, 28
  %s57 = sld [smem:[%s56]]
  %s58 = scalar_lea.smem %s0, 29
  %s59 = sld [smem:[%s58]]
  %s60 = scalar_lea.smem %s0, 30
  %s61 = sld [smem:[%s60]]
  %s62 = scalar_lea.smem %s0, 31
  %s63 = sld [smem:[%s62]]
  %64 = xla_tuple %s59, %s61, %s63
  %s65 = sld [smem:[#allocation0]]
  $region218: #{tpu_custom_call.1} parent=0
    _
  %s67 = ssub.s32 1, %s65
  %s68 = scalar_select 0, %s67, %s65
  %v69 = vstv %s17
  %70 = vst [vmem:[#allocation2] sm:$0x1] %v69
  $region1: #{tpu_custom_call.1} parent=0
    #allocation3 [shape = 'u8[4096]{0}', space=vmem, size = 0x1000, scoped, tag = 'input window, operand 0, single buffered']
    #allocation4 [shape = 's32[1]{0}', space=sflag, size = 0x4, scoped, tag = 'scoped memory for tpu_custom_call.1']
    #allocation5 [shape = 's32[1]{0}', space=sflag, size = 0x4, scoped, tag = 'scoped memory for tpu_custom_call.1']
    #allocation6 [shape = 'u8[16384]{0}', space=vmem, size = 0x4000, scoped, tag = 'input window, operand 1, single buffered']
    #allocation7 [shape = 's32[1]{0}', space=sflag, size = 0x4, scoped, tag = 'scoped memory for tpu_custom_call.1']
    #allocation8 [shape = 'u8[512]{0}', space=vmem, size = 0x400, scoped, tag = 'input window, operand 2, single buffered']
    #allocation9 [shape = 'u8[16384]{0}', space=vmem, size = 0x4000, scoped, tag = 'input window, operand 3, single buffered']
    #allocation10 [shape = 's32[1]{0}', space=sflag, size = 0x4, scoped, tag = 'scoped memory for tpu_custom_call.1']
    #allocation11 [shape = 'u8[512]{0}', space=vmem, size = 0x400, scoped, tag = 'input window, operand 4, single buffered']
    #allocation12 [shape = 'u8[16384]{0}', space=vmem, size = 0x4000, scoped, tag = 'input window, operand 5, single buffered']
    #allocation13 [shape = 's32[1]{0}', space=sflag, size = 0x4, scoped, tag = 'scoped memory for tpu_custom_call.1']
    #allocation14 [shape = 'u8[512]{0}', space=vmem, size = 0x400, scoped, tag = 'input window, operand 6, single buffered']
    #allocation15 [shape = 'u8[512]{0}', space=vmem, size = 0x400, scoped, tag = 'input window, operand 7, single buffered']
    #allocation16 [shape = 's32[1]{0}', space=sflag, size = 0x4, scoped, tag = 'scoped memory for tpu_custom_call.1']
    #allocation17 [shape = 'u8[512]{0}', space=vmem, size = 0x400, scoped, tag = 'input window, operand 10, single buffered']
    #allocation18 [shape = 'u8[512]{0}', space=vmem, size = 0x400, scoped, tag = 'input window, operand 11, single buffered']
    #allocation19 [shape = 's32[1]{0}', space=sflag, size = 0x4, scoped, tag = 'scoped memory for tpu_custom_call.1']
    #allocation20 [shape = 'u8[16384]{0}', space=vmem, size = 0x4000, scoped, tag = 'input window, operand 12, single buffered']
    #allocation21 [shape = 'u8[512]{0}', space=vmem, size = 0x400, scoped, tag = 'input window, operand 13, single buffered']
    #allocation22 [shape = 's32[1]{0}', space=sflag, size = 0x4, scoped, tag = 'scoped memory for tpu_custom_call.1']
    #allocation23 [shape = 'u8[16384]{0}', space=vmem, size = 0x4000, scoped, tag = 'input window, operand 14, single buffered']
    #allocation24 [shape = 'u8[512]{0}', space=vmem, size = 0x400, scoped, tag = 'input window, operand 15, single buffered']
    #allocation25 [shape = 's32[1]{0}', space=sflag, size = 0x4, scoped, tag = 'scoped memory for tpu_custom_call.1']
    #allocation26 [shape = 'u8[16384]{0}', space=vmem, size = 0x4000, scoped, tag = 'input window, operand 16, single buffered']
    #allocation27 [shape = 'u8[512]{0}', space=vmem, size = 0x400, scoped, tag = 'input window, operand 17, single buffered']
    #allocation28 [shape = 's32[1]{0}', space=sflag, size = 0x4, scoped, tag = 'scoped memory for tpu_custom_call.1']
    #allocation29 [shape = 'u8[512]{0}', space=vmem, size = 0x400, scoped, tag = 'input window, operand 18, single buffered']
    #allocation30 [shape = 'u8[16384]{0}', space=vmem, size = 0x4000, scoped, tag = 'input window, operand 21, single buffered']
    #allocation31 [shape = 's32[1]{0}', space=sflag, size = 0x4, scoped, tag = 'scoped memory for tpu_custom_call.1']
    #allocation32 [shape = 'u8[16384]{0}', space=vmem, size = 0x4000, scoped, tag = 'input window, operand 25, single buffered']
    #allocation33 [shape = 'u8[4096]{0}', space=vmem, size = 0x1000, scoped, tag = 'output window, operand 0, single buffered']
    %71 = vsyncpa [#allocation4], 0
    %72 = vsyncpa [#allocation7], 0
    %73 = vsyncpa [#allocation10], 0
    %74 = vsyncpa [#allocation13], 0
    %75 = vsyncpa [#allocation16], 0
    %76 = vsyncpa [#allocation19], 0
    %77 = vsyncpa [#allocation22], 0
    %78 = vsyncpa [#allocation25], 0
    %79 = vsyncpa [#allocation28], 0
    %80 = vsyncpa [#allocation31], 0
    %81 = vsyncpa [#allocation5], 0
    // Predicated region
    $region2: #{tpu_custom_call.1} parent=1 // pred_check
      _
    $region3: #{tpu_custom_call.1} parent=1 // pred_check_branch
      %83 = sbr.rel (0) target = $region5
    $region4: #{tpu_custom_call.1} parent=1 // pred_region
      %s85 = ssub.s32 128, 128
      %86 = vsyncadd [#allocation4], %s85
      %s88 = sshll.u32 [#allocation3], 4
      %s89 = int_to_ptr.vmem [resolvable:$true] %s88
      %91 = dma.hbm_to_vmem [thread:$0]  %s1, 128, %s89, [#allocation4]
    $region5: #{tpu_custom_call.1} parent=1 // pred_fallthru
      _
    // Predicated region
    $region6: #{tpu_custom_call.1} parent=1 // pred_check
      _
    $region7: #{tpu_custom_call.1} parent=1 // pred_check_branch
      %93 = sbr.rel (0) target = $region9
    $region8: #{tpu_custom_call.1} parent=1 // pred_region
      %s95 = ssub.s32 512, 512
      %96 = vsyncadd [#allocation7], %s95
      %s97 = sshll.u32 [#allocation6], 4
      %s98 = int_to_ptr.vmem [resolvable:$true] %s97
      %103 = dma.hbm_to_vmem [thread:$0]  %s3, 512, %s98, [#allocation7], 128, 128, 8
    $region9: #{tpu_custom_call.1} parent=1 // pred_fallthru
      _
    // Predicated region
    $region10: #{tpu_custom_call.1} parent=1 // pred_check
      _
    $region11: #{tpu_custom_call.1} parent=1 // pred_check_branch
      %105 = sbr.rel (0) target = $region13
    $region12: #{tpu_custom_call.1} parent=1 // pred_region
      %s107 = ssub.s32 16, 16
      %108 = vsyncadd [#allocation7], %s107
      %s110 = sshll.u32 [#allocation8], 4
      %s111 = int_to_ptr.vmem [resolvable:$true] %s110
      %113 = dma.hbm_to_vmem [thread:$0]  %s5, 16, %s111, [#allocation7]
    $region13: #{tpu_custom_call.1} parent=1 // pred_fallthru
      _
    // Predicated region
    $region14: #{tpu_custom_call.1} parent=1 // pred_check
      _
    $region15: #{tpu_custom_call.1} parent=1 // pred_check_branch
      %115 = sbr.rel (0) target = $region17
    $region16: #{tpu_custom_call.1} parent=1 // pred_region
      %s117 = ssub.s32 512, 512
      %118 = vsyncadd [#allocation10], %s117
      %s119 = sshll.u32 [#allocation9], 4
      %s120 = int_to_ptr.vmem [resolvable:$true] %s119
      %125 = dma.hbm_to_vmem [thread:$0]  %s7, 512, %s120, [#allocation10], 128, 128, 8
    $region17: #{tpu_custom_call.1} parent=1 // pred_fallthru
      _
    // Predicated region
    $region18: #{tpu_custom_call.1} parent=1 // pred_check
      _
    $region19: #{tpu_custom_call.1} parent=1 // pred_check_branch
      %127 = sbr.rel (0) target = $region21
    $region20: #{tpu_custom_call.1} parent=1 // pred_region
      %s129 = ssub.s32 16, 16
      %130 = vsyncadd [#allocation10], %s129
      %s132 = sshll.u32 [#allocation11], 4
      %s133 = int_to_ptr.vmem [resolvable:$true] %s132
      %135 = dma.hbm_to_vmem [thread:$0]  %s9, 16, %s133, [#allocation10]
    $region21: #{tpu_custom_call.1} parent=1 // pred_fallthru
      _
    // Predicated region
    $region22: #{tpu_custom_call.1} parent=1 // pred_check
      _
    $region23: #{tpu_custom_call.1} parent=1 // pred_check_branch
      %137 = sbr.rel (0) target = $region25
    $region24: #{tpu_custom_call.1} parent=1 // pred_region
      %s139 = ssub.s32 512, 512
      %140 = vsyncadd [#allocation13], %s139
      %s141 = sshll.u32 [#allocation12], 4
      %s142 = int_to_ptr.vmem [resolvable:$true] %s141
      %147 = dma.hbm_to_vmem [thread:$0]  %s11, 512, %s142, [#allocation13], 128, 128, 8
    $region25: #{tpu_custom_call.1} parent=1 // pred_fallthru
      _
    // Predicated region
    $region26: #{tpu_custom_call.1} parent=1 // pred_check
      _
    $region27: #{tpu_custom_call.1} parent=1 // pred_check_branch
      %149 = sbr.rel (0) target = $region29
    $region28: #{tpu_custom_call.1} parent=1 // pred_region
      %s151 = ssub.s32 16, 16
      %152 = vsyncadd [#allocation13], %s151
      %s154 = sshll.u32 [#allocation14], 4
      %s155 = int_to_ptr.vmem [resolvable:$true] %s154
      %157 = dma.hbm_to_vmem [thread:$0]  %s13, 16, %s155, [#allocation13]
    $region29: #{tpu_custom_call.1} parent=1 // pred_fallthru
      _
    // Predicated region
    $region30: #{tpu_custom_call.1} parent=1 // pred_check
      _
    $region31: #{tpu_custom_call.1} parent=1 // pred_check_branch
      %159 = sbr.rel (0) target = $region33
    $region32: #{tpu_custom_call.1} parent=1 // pred_region
      %s161 = ssub.s32 16, 16
      %162 = vsyncadd [#allocation16], %s161
      %s164 = sshll.u32 [#allocation15], 4
      %s165 = int_to_ptr.vmem [resolvable:$true] %s164
      %167 = dma.hbm_to_vmem [thread:$0]  %s15, 16, %s165, [#allocation16]
    $region33: #{tpu_custom_call.1} parent=1 // pred_fallthru
      _
    // Predicated region
    $region34: #{tpu_custom_call.1} parent=1 // pred_check
      _
    $region35: #{tpu_custom_call.1} parent=1 // pred_check_branch
      %169 = sbr.rel (0) target = $region37
    $region36: #{tpu_custom_call.1} parent=1 // pred_region
      _
    $region37: #{tpu_custom_call.1} parent=1 // pred_fallthru
      _
    // Predicated region
    $region38: #{tpu_custom_call.1} parent=1 // pred_check
      _
    $region39: #{tpu_custom_call.1} parent=1 // pred_check_branch
      %171 = sbr.rel (0) target = $region41
    $region40: #{tpu_custom_call.1} parent=1 // pred_region
      _
    $region41: #{tpu_custom_call.1} parent=1 // pred_fallthru
      _
    // Predicated region
    $region42: #{tpu_custom_call.1} parent=1 // pred_check
      _
    $region43: #{tpu_custom_call.1} parent=1 // pred_check_branch
      %173 = sbr.rel (0) target = $region45
    $region44: #{tpu_custom_call.1} parent=1 // pred_region
      %s175 = ssub.s32 16, 16
      %176 = vsyncadd [#allocation16], %s175
      %s178 = sshll.u32 [#allocation17], 4
      %s179 = int_to_ptr.vmem [resolvable:$true] %s178
      %181 = dma.hbm_to_vmem [thread:$0]  %s21, 16, %s179, [#allocation16]
    $region45: #{tpu_custom_call.1} parent=1 // pred_fallthru
      _
    // Predicated region
    $region46: #{tpu_custom_call.1} parent=1 // pred_check
      _
    $region47: #{tpu_custom_call.1} parent=1 // pred_check_branch
      %183 = sbr.rel (0) target = $region49
    $region48: #{tpu_custom_call.1} parent=1 // pred_region
      %s185 = ssub.s32 16, 16
      %186 = vsyncadd [#allocation19], %s185
      %s188 = sshll.u32 [#allocation18], 4
      %s189 = int_to_ptr.vmem [resolvable:$true] %s188
      %191 = dma.hbm_to_vmem [thread:$0]  %s23, 16, %s189, [#allocation19]
    $region49: #{tpu_custom_call.1} parent=1 // pred_fallthru
      _
    // Predicated region
    $region50: #{tpu_custom_call.1} parent=1 // pred_check
      _
    $region51: #{tpu_custom_call.1} parent=1 // pred_check_branch
      %193 = sbr.rel (0) target = $region53
    $region52: #{tpu_custom_call.1} parent=1 // pred_region
      %s195 = ssub.s32 512, 512
      %196 = vsyncadd [#allocation19], %s195
      %s197 = sshll.u32 [#allocation20], 4
      %s198 = int_to_ptr.vmem [resolvable:$true] %s197
      %203 = dma.hbm_to_vmem [thread:$0]  %s25, 512, %s198, [#allocation19], 128, 128, 8
    $region53: #{tpu_custom_call.1} parent=1 // pred_fallthru
      _
    // Predicated region
    $region54: #{tpu_custom_call.1} parent=1 // pred_check
      _
    $region55: #{tpu_custom_call.1} parent=1 // pred_check_branch
      %205 = sbr.rel (0) target = $region57
    $region56: #{tpu_custom_call.1} parent=1 // pred_region
      %s207 = ssub.s32 16, 16
      %208 = vsyncadd [#allocation22], %s207
      %s210 = sshll.u32 [#allocation21], 4
      %s211 = int_to_ptr.vmem [resolvable:$true] %s210
      %213 = dma.hbm_to_vmem [thread:$0]  %s27, 16, %s211, [#allocation22]
    $region57: #{tpu_custom_call.1} parent=1 // pred_fallthru
      _
    // Predicated region
    $region58: #{tpu_custom_call.1} parent=1 // pred_check
      _
    $region59: #{tpu_custom_call.1} parent=1 // pred_check_branch
      %215 = sbr.rel (0) target = $region61
    $region60: #{tpu_custom_call.1} parent=1 // pred_region
      %s217 = ssub.s32 512, 512
      %218 = vsyncadd [#allocation22], %s217
      %s219 = sshll.u32 [#allocation23], 4
      %s220 = int_to_ptr.vmem [resolvable:$true] %s219
      %225 = dma.hbm_to_vmem [thread:$0]  %s29, 512, %s220, [#allocation22], 128, 128, 8
    $region61: #{tpu_custom_call.1} parent=1 // pred_fallthru
      _
    // Predicated region
    $region62: #{tpu_custom_call.1} parent=1 // pred_check
      _
    $region63: #{tpu_custom_call.1} parent=1 // pred_check_branch
      %227 = sbr.rel (0) target = $region65
    $region64: #{tpu_custom_call.1} parent=1 // pred_region
      %s229 = ssub.s32 16, 16
      %230 = vsyncadd [#allocation25], %s229
      %s232 = sshll.u32 [#allocation24], 4
      %s233 = int_to_ptr.vmem [resolvable:$true] %s232
      %235 = dma.hbm_to_vmem [thread:$0]  %s31, 16, %s233, [#allocation25]
    $region65: #{tpu_custom_call.1} parent=1 // pred_fallthru
      _
    // Predicated region
    $region66: #{tpu_custom_call.1} parent=1 // pred_check
      _
    $region67: #{tpu_custom_call.1} parent=1 // pred_check_branch
      %237 = sbr.rel (0) target = $region69
    $region68: #{tpu_custom_call.1} parent=1 // pred_region
      %s239 = ssub.s32 512, 512
      %240 = vsyncadd [#allocation25], %s239
      %s241 = sshll.u32 [#allocation26], 4
      %s242 = int_to_ptr.vmem [resolvable:$true] %s241
      %247 = dma.hbm_to_vmem [thread:$0]  %s33, 512, %s242, [#allocation25], 128, 128, 8
    $region69: #{tpu_custom_call.1} parent=1 // pred_fallthru
      _
    // Predicated region
    $region70: #{tpu_custom_call.1} parent=1 // pred_check
      _
    $region71: #{tpu_custom_call.1} parent=1 // pred_check_branch
      %249 = sbr.rel (0) target = $region73
    $region72: #{tpu_custom_call.1} parent=1 // pred_region
      %s251 = ssub.s32 16, 16
      %252 = vsyncadd [#allocation28], %s251
      %s254 = sshll.u32 [#allocation27], 4
      %s255 = int_to_ptr.vmem [resolvable:$true] %s254
      %257 = dma.hbm_to_vmem [thread:$0]  %s35, 16, %s255, [#allocation28]
    $region73: #{tpu_custom_call.1} parent=1 // pred_fallthru
      _
    // Predicated region
    $region74: #{tpu_custom_call.1} parent=1 // pred_check
      _
    $region75: #{tpu_custom_call.1} parent=1 // pred_check_branch
      %259 = sbr.rel (0) target = $region77
    $region76: #{tpu_custom_call.1} parent=1 // pred_region
      %s261 = ssub.s32 16, 16
      %262 = vsyncadd [#allocation28], %s261
      %s264 = sshll.u32 [#allocation29], 4
      %s265 = int_to_ptr.vmem [resolvable:$true] %s264
      %267 = dma.hbm_to_vmem [thread:$0]  %s37, 16, %s265, [#allocation28]
    $region77: #{tpu_custom_call.1} parent=1 // pred_fallthru
      _
    // Predicated region
    $region78: #{tpu_custom_call.1} parent=1 // pred_check
      _
    $region79: #{tpu_custom_call.1} parent=1 // pred_check_branch
      %269 = sbr.rel (0) target = $region81
    $region80: #{tpu_custom_call.1} parent=1 // pred_region
      _
    $region81: #{tpu_custom_call.1} parent=1 // pred_fallthru
      _
    // Predicated region
    $region82: #{tpu_custom_call.1} parent=1 // pred_check
      _
    $region83: #{tpu_custom_call.1} parent=1 // pred_check_branch
      %271 = sbr.rel (0) target = $region85
    $region84: #{tpu_custom_call.1} parent=1 // pred_region
      _
    $region85: #{tpu_custom_call.1} parent=1 // pred_fallthru
      _
    // Predicated region
    $region86: #{tpu_custom_call.1} parent=1 // pred_check
      _
    $region87: #{tpu_custom_call.1} parent=1 // pred_check_branch
      %273 = sbr.rel (0) target = $region89
    $region88: #{tpu_custom_call.1} parent=1 // pred_region
      %s275 = ssub.s32 512, 512
      %276 = vsyncadd [#allocation31], %s275
      %s277 = sshll.u32 [#allocation30], 4
      %s278 = int_to_ptr.vmem [resolvable:$true] %s277
      %283 = dma.hbm_to_vmem [thread:$0]  %s43, 512, %s278, [#allocation31], 128, 128, 8
    $region89: #{tpu_custom_call.1} parent=1 // pred_fallthru
      _
    // Predicated region
    $region90: #{tpu_custom_call.1} parent=1 // pred_check
      _
    $region91: #{tpu_custom_call.1} parent=1 // pred_check_branch
      %285 = sbr.rel (0) target = $region93
    $region92: #{tpu_custom_call.1} parent=1 // pred_region
      _
    $region93: #{tpu_custom_call.1} parent=1 // pred_fallthru
      _
    // Predicated region
    $region94: #{tpu_custom_call.1} parent=1 // pred_check
      _
    $region95: #{tpu_custom_call.1} parent=1 // pred_check_branch
      %287 = sbr.rel (0) target = $region97
    $region96: #{tpu_custom_call.1} parent=1 // pred_region
      _
    $region97: #{tpu_custom_call.1} parent=1 // pred_fallthru
      _
    // Predicated region
    $region98: #{tpu_custom_call.1} parent=1 // pred_check
      _
    $region99: #{tpu_custom_call.1} parent=1 // pred_check_branch
      %289 = sbr.rel (0) target = $region101
    $region100: #{tpu_custom_call.1} parent=1 // pred_region
      _
    $region101: #{tpu_custom_call.1} parent=1 // pred_fallthru
      _
    // Predicated region
    $region102: #{tpu_custom_call.1} parent=1 // pred_check
      _
    $region103: #{tpu_custom_call.1} parent=1 // pred_check_branch
      %291 = sbr.rel (0) target = $region105
    $region104: #{tpu_custom_call.1} parent=1 // pred_region
      %s293 = ssub.s32 512, 512
      %294 = vsyncadd [#allocation31], %s293
      %s295 = sshll.u32 [#allocation32], 4
      %s296 = int_to_ptr.vmem [resolvable:$true] %s295
      %301 = dma.hbm_to_vmem [thread:$0]  %s51, 512, %s296, [#allocation31], 128, 128, 8
    $region105: #{tpu_custom_call.1} parent=1 // pred_fallthru
      _
    // Predicated region
    $region106: #{tpu_custom_call.1} parent=1 // pred_check
      _
    $region107: #{tpu_custom_call.1} parent=1 // pred_check_branch
      %303 = sbr.rel (0) target = $region109
    $region108: #{tpu_custom_call.1} parent=1 // pred_region
      _
    $region109: #{tpu_custom_call.1} parent=1 // pred_fallthru
      _
    // Predicated region
    $region110: #{tpu_custom_call.1} parent=1 // pred_check
      _
    $region111: #{tpu_custom_call.1} parent=1 // pred_check_branch
      %305 = sbr.rel (0) target = $region113
    $region112: #{tpu_custom_call.1} parent=1 // pred_region
      _
    $region113: #{tpu_custom_call.1} parent=1 // pred_fallthru
      _
    // Predicated region
    $region114: #{tpu_custom_call.1} parent=1 // pred_check
      _
    $region115: #{tpu_custom_call.1} parent=1 // pred_check_branch
      %307 = sbr.rel (0) target = $region117
    $region116: #{tpu_custom_call.1} parent=1 // pred_region
      _
    $region117: #{tpu_custom_call.1} parent=1 // pred_fallthru
      _
    // Predicated region
    $region118: #{tpu_custom_call.1} parent=1 // pred_check
      _
    $region119: #{tpu_custom_call.1} parent=1 // pred_check_branch
      %309 = sbr.rel (0) target = $region121
    $region120: #{tpu_custom_call.1} parent=1 // pred_region
      %310 = dma.done [#allocation4], 128
    $region121: #{tpu_custom_call.1} parent=1 // pred_fallthru
      _
    // Predicated region
    $region122: #{tpu_custom_call.1} parent=1 // pred_check
      _
    $region123: #{tpu_custom_call.1} parent=1 // pred_check_branch
      %312 = sbr.rel (0) target = $region125
    $region124: #{tpu_custom_call.1} parent=1 // pred_region
      %313 = dma.done [#allocation7], 512
    $region125: #{tpu_custom_call.1} parent=1 // pred_fallthru
      _
    // Predicated region
    $region126: #{tpu_custom_call.1} parent=1 // pred_check
      _
    $region127: #{tpu_custom_call.1} parent=1 // pred_check_branch
      %315 = sbr.rel (0) target = $region129
    $region128: #{tpu_custom_call.1} parent=1 // pred_region
      %316 = dma.done [#allocation7], 16
    $region129: #{tpu_custom_call.1} parent=1 // pred_fallthru
      _
    // Predicated region
    $region130: #{tpu_custom_call.1} parent=1 // pred_check
      _
    $region131: #{tpu_custom_call.1} parent=1 // pred_check_branch
      %318 = sbr.rel (0) target = $region133
    $region132: #{tpu_custom_call.1} parent=1 // pred_region
      %319 = dma.done [#allocation10], 512
    $region133: #{tpu_custom_call.1} parent=1 // pred_fallthru
      _
    // Predicated region
    $region134: #{tpu_custom_call.1} parent=1 // pred_check
      _
    $region135: #{tpu_custom_call.1} parent=1 // pred_check_branch
      %321 = sbr.rel (0) target = $region137
    $region136: #{tpu_custom_call.1} parent=1 // pred_region
      %322 = dma.done [#allocation10], 16
    $region137: #{tpu_custom_call.1} parent=1 // pred_fallthru
      _
    // Predicated region
    $region138: #{tpu_custom_call.1} parent=1 // pred_check
      _
    $region139: #{tpu_custom_call.1} parent=1 // pred_check_branch
      %324 = sbr.rel (0) target = $region141
    $region140: #{tpu_custom_call.1} parent=1 // pred_region
      %325 = dma.done [#allocation13], 512
    $region141: #{tpu_custom_call.1} parent=1 // pred_fallthru
      _
    // Predicated region
    $region142: #{tpu_custom_call.1} parent=1 // pred_check
      _
    $region143: #{tpu_custom_call.1} parent=1 // pred_check_branch
      %327 = sbr.rel (0) target = $region145
    $region144: #{tpu_custom_call.1} parent=1 // pred_region
      %328 = dma.done [#allocation13], 16
    $region145: #{tpu_custom_call.1} parent=1 // pred_fallthru
      _
    // Predicated region
    $region146: #{tpu_custom_call.1} parent=1 // pred_check
      _
    $region147: #{tpu_custom_call.1} parent=1 // pred_check_branch
      %330 = sbr.rel (0) target = $region149
    $region148: #{tpu_custom_call.1} parent=1 // pred_region
      %331 = dma.done [#allocation16], 16
    $region149: #{tpu_custom_call.1} parent=1 // pred_fallthru
      _
    // Predicated region
    $region150: #{tpu_custom_call.1} parent=1 // pred_check
      _
    $region151: #{tpu_custom_call.1} parent=1 // pred_check_branch
      %333 = sbr.rel (0) target = $region153
    $region152: #{tpu_custom_call.1} parent=1 // pred_region
      %334 = dma.done [#allocation16], 16
    $region153: #{tpu_custom_call.1} parent=1 // pred_fallthru
      _
    // Predicated region
    $region154: #{tpu_custom_call.1} parent=1 // pred_check
      _
    $region155: #{tpu_custom_call.1} parent=1 // pred_check_branch
      %336 = sbr.rel (0) target = $region157
    $region156: #{tpu_custom_call.1} parent=1 // pred_region
      %337 = dma.done [#allocation19], 16
    $region157: #{tpu_custom_call.1} parent=1 // pred_fallthru
      _
    // Predicated region
    $region158: #{tpu_custom_call.1} parent=1 // pred_check
      _
    $region159: #{tpu_custom_call.1} parent=1 // pred_check_branch
      %339 = sbr.rel (0) target = $region161
    $region160: #{tpu_custom_call.1} parent=1 // pred_region
      %340 = dma.done [#allocation19], 512
    $region161: #{tpu_custom_call.1} parent=1 // pred_fallthru
      _
    // Predicated region
    $region162: #{tpu_custom_call.1} parent=1 // pred_check
      _
    $region163: #{tpu_custom_call.1} parent=1 // pred_check_branch
      %342 = sbr.rel (0) target = $region165
    $region164: #{tpu_custom_call.1} parent=1 // pred_region
      %343 = dma.done [#allocation22], 16
    $region165: #{tpu_custom_call.1} parent=1 // pred_fallthru
      _
    // Predicated region
    $region166: #{tpu_custom_call.1} parent=1 // pred_check
      _
    $region167: #{tpu_custom_call.1} parent=1 // pred_check_branch
      %345 = sbr.rel (0) target = $region169
    $region168: #{tpu_custom_call.1} parent=1 // pred_region
      %346 = dma.done [#allocation22], 512
    $region169: #{tpu_custom_call.1} parent=1 // pred_fallthru
      _
    // Predicated region
    $region170: #{tpu_custom_call.1} parent=1 // pred_check
      _
    $region171: #{tpu_custom_call.1} parent=1 // pred_check_branch
      %348 = sbr.rel (0) target = $region173
    $region172: #{tpu_custom_call.1} parent=1 // pred_region
      %349 = dma.done [#allocation25], 16
    $region173: #{tpu_custom_call.1} parent=1 // pred_fallthru
      _
    // Predicated region
    $region174: #{tpu_custom_call.1} parent=1 // pred_check
      _
    $region175: #{tpu_custom_call.1} parent=1 // pred_check_branch
      %351 = sbr.rel (0) target = $region177
    $region176: #{tpu_custom_call.1} parent=1 // pred_region
      %352 = dma.done [#allocation25], 512
    $region177: #{tpu_custom_call.1} parent=1 // pred_fallthru
      _
    // Predicated region
    $region178: #{tpu_custom_call.1} parent=1 // pred_check
      _
    $region179: #{tpu_custom_call.1} parent=1 // pred_check_branch
      %354 = sbr.rel (0) target = $region181
    $region180: #{tpu_custom_call.1} parent=1 // pred_region
      %355 = dma.done [#allocation28], 16
    $region181: #{tpu_custom_call.1} parent=1 // pred_fallthru
      _
    // Predicated region
    $region182: #{tpu_custom_call.1} parent=1 // pred_check
      _
    $region183: #{tpu_custom_call.1} parent=1 // pred_check_branch
      %357 = sbr.rel (0) target = $region185
    $region184: #{tpu_custom_call.1} parent=1 // pred_region
      %358 = dma.done [#allocation28], 16
    $region185: #{tpu_custom_call.1} parent=1 // pred_fallthru
      _
    // Predicated region
    $region186: #{tpu_custom_call.1} parent=1 // pred_check
      _
    $region187: #{tpu_custom_call.1} parent=1 // pred_check_branch
      %360 = sbr.rel (0) target = $region189
    $region188: #{tpu_custom_call.1} parent=1 // pred_region
      %361 = dma.done [#allocation31], 512
    $region189: #{tpu_custom_call.1} parent=1 // pred_fallthru
      _
    // Predicated region
    $region190: #{tpu_custom_call.1} parent=1 // pred_check
      _
    $region191: #{tpu_custom_call.1} parent=1 // pred_check_branch
      %363 = sbr.rel (0) target = $region193
    $region192: #{tpu_custom_call.1} parent=1 // pred_region
      %364 = dma.done [#allocation31], 512
    $region193: #{tpu_custom_call.1} parent=1 // pred_fallthru
      _
    %v365 = vld [vmem:[#allocation3] sm:$0xff]
    %v366 = vld [vmem:[#allocation6] sm:$0xff]
    %v367 = vld [vmem:[#allocation6 + $0x8] sm:$0xff]
    %v368 = vld [vmem:[#allocation6 + $0x10] sm:$0xff]
    %v369 = vld [vmem:[#allocation6 + $0x18] sm:$0xff]
    %v370 = vld [vmem:[#allocation8] sm:$0x1]
    %v372 = vlaneseq
    %v373 = vshrl.u32 %v372, 7
    %v374 = vsub.s32 0, %v373
    %v375 = vrot.slane %v370, %v374
    %vm377 = vcmask 261120
    %v379 = vsel %vm377, %v365, 0
    %381 = vmatprep.subr.mxu0 0.0
    %382 = vmatpush1.msra.mxu0 %v366
    %383 = vmatprep.subr.mxu0 0.0
    %384 = vmatpush1.msra.mxu0 %v367
    %385 = vmatprep.subr.mxu0 0.0
    %386 = vmatpush1.msra.mxu0 %v368
    %387 = vmatprep.subr.mxu0 0.0
    %388 = vmatpush1.msra.mxu0 %v369
    %389 = vmatprep.subr.mxu0 0.0
    %390 = vmatpush1.msra.mxu0 0.0
    %391 = vmatprep.subr.mxu0 0.0
    %392 = vmatpush1.msra.mxu0 0.0
    %393 = vmatprep.subr.mxu0 0.0
    %394 = vmatpush1.msra.mxu0 0.0
    %395 = vmatprep.subr.mxu0 0.0
    %396 = vmatpush1.msra.mxu0 0.0
    %397 = vmatprep.subr.mxu0 0.0
    %398 = vmatpush1.msra.mxu0 0.0
    %399 = vmatprep.subr.mxu0 0.0
    %400 = vmatpush1.msra.mxu0 0.0
    %401 = vmatprep.subr.mxu0 0.0
    %402 = vmatpush1.msra.mxu0 0.0
    %403 = vmatprep.subr.mxu0 0.0
    %404 = vmatpush1.msra.mxu0 0.0
    %405 = vmatprep.subr.mxu0 0.0
    %406 = vmatpush1.msra.mxu0 0.0
    %407 = vmatprep.subr.mxu0 0.0
    %408 = vmatpush1.msra.mxu0 0.0
    %409 = vmatprep.subr.mxu0 0.0
    %410 = vmatpush1.msra.mxu0 0.0
    %411 = vmatprep.subr.mxu0 0.0
    %412 = vmatpush1.msra.mxu0 0.0
    %413 = vmatprep.subr.mxu0 0.0
    %414 = vmatpush1.msra.mxu0 0.0
    %415 = vmatprep.subr.mxu0 0.0
    %416 = vmatpush1.msra.mxu0 0.0
    %417 = vmatprep.subr.mxu0 0.0
    %418 = vmatpush1.msra.mxu0 0.0
    %419 = vmatprep.subr.mxu0 0.0
    %420 = vmatpush1.msra.mxu0 0.0
    %421 = vmatprep.subr.mxu0 0.0
    %422 = vmatpush1.msra.mxu0 0.0
    %423 = vmatprep.subr.mxu0 0.0
    %424 = vmatpush1.msra.mxu0 0.0
    %425 = vmatprep.subr.mxu0 0.0
    %426 = vmatpush1.msra.mxu0 0.0
    %427 = vmatprep.subr.mxu0 0.0
    %428 = vmatpush1.msra.mxu0 0.0
    %429 = vmatprep.subr.mxu0 0.0
    %430 = vmatpush1.msra.mxu0 0.0
    %431 = vmatprep.subr.mxu0 0.0
    %432 = vmatpush1.msra.mxu0 0.0
    %433 = vmatprep.subr.mxu0 0.0
    %434 = vmatpush1.msra.mxu0 0.0
    %435 = vmatprep.subr.mxu0 0.0
    %436 = vmatpush1.msra.mxu0 0.0
    %437 = vmatprep.subr.mxu0 0.0
    %438 = vmatpush1.msra.mxu0 0.0
    %439 = vmatprep.subr.mxu0 0.0
    %440 = vmatpush1.msra.mxu0 0.0
    %441 = vmatprep.subr.mxu0 0.0
    %442 = vmatpush1.msra.mxu0 0.0
    %443 = vmatprep.subr.mxu0 0.0
    %444 = vmatpush1.msra.mxu0 0.0
    %445 = vmatprep.mubr.f32.mxu0 0.0
    %446 = vmatmul.mubr.f32.gmra.mrb[0].mxu0 %v379
    %v447 = vpop.f32.mrb[0].mxu0
    %v448 = vadd.f32 %v375, %v447
    %v449 = vpop.f32.mrb[0].mxu0
    %450 = vdwg.mxu0
    %vm451 = vcmp.gt.f32.partialorder %v448, 0.0
    %v452 = vmul.f32 %v448, 1.442695
    %v453 = vpow.pop %v452
    %v454 = vsub.f32 %v453, 1.0
    %v455 = vsel %vm451, %v448, %v454
    %v456 = vld [vmem:[#allocation9] sm:$0xff]
    %v457 = vld [vmem:[#allocation9 + $0x8] sm:$0xff]
    %v458 = vld [vmem:[#allocation9 + $0x10] sm:$0xff]
    %v459 = vld [vmem:[#allocation9 + $0x18] sm:$0xff]
    %v460 = vld [vmem:[#allocation11] sm:$0x1]
    %v462 = vlaneseq
    %v463 = vshrl.u32 %v462, 7
    %v464 = vsub.s32 0, %v463
    %v465 = vrot.slane %v460, %v464
    %v468 = vsel %vm377, %v455, 0
    %470 = vmatprep.subr.mxu0 0.0
    %471 = vmatpush1.msra.mxu0 %v456
    %472 = vmatprep.subr.mxu0 0.0
    %473 = vmatpush1.msra.mxu0 %v457
    %474 = vmatprep.subr.mxu0 0.0
    %475 = vmatpush1.msra.mxu0 %v458
    %476 = vmatprep.subr.mxu0 0.0
    %477 = vmatpush1.msra.mxu0 %v459
    %478 = vmatprep.subr.mxu0 0.0
    %479 = vmatpush1.msra.mxu0 0.0
    %480 = vmatprep.subr.mxu0 0.0
    %481 = vmatpush1.msra.mxu0 0.0
    %482 = vmatprep.subr.mxu0 0.0
    %483 = vmatpush1.msra.mxu0 0.0
    %484 = vmatprep.subr.mxu0 0.0
    %485 = vmatpush1.msra.mxu0 0.0
    %486 = vmatprep.subr.mxu0 0.0
    %487 = vmatpush1.msra.mxu0 0.0
    %488 = vmatprep.subr.mxu0 0.0
    %489 = vmatpush1.msra.mxu0 0.0
    %490 = vmatprep.subr.mxu0 0.0
    %491 = vmatpush1.msra.mxu0 0.0
    %492 = vmatprep.subr.mxu0 0.0
    %493 = vmatpush1.msra.mxu0 0.0
    %494 = vmatprep.subr.mxu0 0.0
    %495 = vmatpush1.msra.mxu0 0.0
    %496 = vmatprep.subr.mxu0 0.0
    %497 = vmatpush1.msra.mxu0 0.0
    %498 = vmatprep.subr.mxu0 0.0
    %499 = vmatpush1.msra.mxu0 0.0
    %500 = vmatprep.subr.mxu0 0.0
    %501 = vmatpush1.msra.mxu0 0.0
    %502 = vmatprep.subr.mxu0 0.0
    %503 = vmatpush1.msra.mxu0 0.0
    %504 = vmatprep.subr.mxu0 0.0
    %505 = vmatpush1.msra.mxu0 0.0
    %506 = vmatprep.subr.mxu0 0.0
    %507 = vmatpush1.msra.mxu0 0.0
    %508 = vmatprep.subr.mxu0 0.0
    %509 = vmatpush1.msra.mxu0 0.0
    %510 = vmatprep.subr.mxu0 0.0
    %511 = vmatpush1.msra.mxu0 0.0
    %512 = vmatprep.subr.mxu0 0.0
    %513 = vmatpush1.msra.mxu0 0.0
    %514 = vmatprep.subr.mxu0 0.0
    %515 = vmatpush1.msra.mxu0 0.0
    %516 = vmatprep.subr.mxu0 0.0
    %517 = vmatpush1.msra.mxu0 0.0
    %518 = vmatprep.subr.mxu0 0.0
    %519 = vmatpush1.msra.mxu0 0.0
    %520 = vmatprep.subr.mxu0 0.0
    %521 = vmatpush1.msra.mxu0 0.0
    %522 = vmatprep.subr.mxu0 0.0
    %523 = vmatpush1.msra.mxu0 0.0
    %524 = vmatprep.subr.mxu0 0.0
    %525 = vmatpush1.msra.mxu0 0.0
    %526 = vmatprep.subr.mxu0 0.0
    %527 = vmatpush1.msra.mxu0 0.0
    %528 = vmatprep.subr.mxu0 0.0
    %529 = vmatpush1.msra.mxu0 0.0
    %530 = vmatprep.subr.mxu0 0.0
    %531 = vmatpush1.msra.mxu0 0.0
    %532 = vmatprep.subr.mxu0 0.0
    %533 = vmatpush1.msra.mxu0 0.0
    %534 = vmatprep.mubr.f32.mxu0 0.0
    %535 = vmatmul.mubr.f32.gmra.mrb[0].mxu0 %v468
    %v536 = vpop.f32.mrb[0].mxu0
    %v537 = vadd.f32 %v465, %v536
    %v538 = vpop.f32.mrb[0].mxu0
    %539 = vdwg.mxu0
    %vm540 = vcmp.gt.f32.partialorder %v537, 0.0
    %v541 = vmul.f32 %v537, 1.442695
    %v542 = vpow.pop %v541
    %v543 = vsub.f32 %v542, 1.0
    %v544 = vsel %vm540, %v537, %v543
    %v545 = vld [vmem:[#allocation12] sm:$0xff]
    %v546 = vld [vmem:[#allocation12 + $0x8] sm:$0xff]
    %v547 = vld [vmem:[#allocation12 + $0x10] sm:$0xff]
    %v548 = vld [vmem:[#allocation12 + $0x18] sm:$0xff]
    %v549 = vld [vmem:[#allocation14] sm:$0x1]
    %v551 = vlaneseq
    %v552 = vshrl.u32 %v551, 7
    %v553 = vsub.s32 0, %v552
    %v554 = vrot.slane %v549, %v553
    %v557 = vsel %vm377, %v544, 0
    %559 = vmatprep.subr.mxu0 0.0
    %560 = vmatpush1.msra.mxu0 %v545
    %561 = vmatprep.subr.mxu0 0.0
    %562 = vmatpush1.msra.mxu0 %v546
    %563 = vmatprep.subr.mxu0 0.0
    %564 = vmatpush1.msra.mxu0 %v547
    %565 = vmatprep.subr.mxu0 0.0
    %566 = vmatpush1.msra.mxu0 %v548
    %567 = vmatprep.subr.mxu0 0.0
    %568 = vmatpush1.msra.mxu0 0.0
    %569 = vmatprep.subr.mxu0 0.0
    %570 = vmatpush1.msra.mxu0 0.0
    %571 = vmatprep.subr.mxu0 0.0
    %572 = vmatpush1.msra.mxu0 0.0
    %573 = vmatprep.subr.mxu0 0.0
    %574 = vmatpush1.msra.mxu0 0.0
    %575 = vmatprep.subr.mxu0 0.0
    %576 = vmatpush1.msra.mxu0 0.0
    %577 = vmatprep.subr.mxu0 0.0
    %578 = vmatpush1.msra.mxu0 0.0
    %579 = vmatprep.subr.mxu0 0.0
    %580 = vmatpush1.msra.mxu0 0.0
    %581 = vmatprep.subr.mxu0 0.0
    %582 = vmatpush1.msra.mxu0 0.0
    %583 = vmatprep.subr.mxu0 0.0
    %584 = vmatpush1.msra.mxu0 0.0
    %585 = vmatprep.subr.mxu0 0.0
    %586 = vmatpush1.msra.mxu0 0.0
    %587 = vmatprep.subr.mxu0 0.0
    %588 = vmatpush1.msra.mxu0 0.0
    %589 = vmatprep.subr.mxu0 0.0
    %590 = vmatpush1.msra.mxu0 0.0
    %591 = vmatprep.subr.mxu0 0.0
    %592 = vmatpush1.msra.mxu0 0.0
    %593 = vmatprep.subr.mxu0 0.0
    %594 = vmatpush1.msra.mxu0 0.0
    %595 = vmatprep.subr.mxu0 0.0
    %596 = vmatpush1.msra.mxu0 0.0
    %597 = vmatprep.subr.mxu0 0.0
    %598 = vmatpush1.msra.mxu0 0.0
    %599 = vmatprep.subr.mxu0 0.0
    %600 = vmatpush1.msra.mxu0 0.0
    %601 = vmatprep.subr.mxu0 0.0
    %602 = vmatpush1.msra.mxu0 0.0
    %603 = vmatprep.subr.mxu0 0.0
    %604 = vmatpush1.msra.mxu0 0.0
    %605 = vmatprep.subr.mxu0 0.0
    %606 = vmatpush1.msra.mxu0 0.0
    %607 = vmatprep.subr.mxu0 0.0
    %608 = vmatpush1.msra.mxu0 0.0
    %609 = vmatprep.subr.mxu0 0.0
    %610 = vmatpush1.msra.mxu0 0.0
    %611 = vmatprep.subr.mxu0 0.0
    %612 = vmatpush1.msra.mxu0 0.0
    %613 = vmatprep.subr.mxu0 0.0
    %614 = vmatpush1.msra.mxu0 0.0
    %615 = vmatprep.subr.mxu0 0.0
    %616 = vmatpush1.msra.mxu0 0.0
    %617 = vmatprep.subr.mxu0 0.0
    %618 = vmatpush1.msra.mxu0 0.0
    %619 = vmatprep.subr.mxu0 0.0
    %620 = vmatpush1.msra.mxu0 0.0
    %621 = vmatprep.subr.mxu0 0.0
    %622 = vmatpush1.msra.mxu0 0.0
    %623 = vmatprep.mubr.f32.mxu0 0.0
    %624 = vmatmul.mubr.f32.gmra.mrb[0].mxu0 %v557
    %v625 = vpop.f32.mrb[0].mxu0
    %v626 = vadd.f32 %v554, %v625
    %v627 = vpop.f32.mrb[0].mxu0
    %628 = vdwg.mxu0
    %vm629 = vcmp.gt.f32.partialorder %v626, 0.0
    %v630 = vmul.f32 %v626, 1.442695
    %v631 = vpow.pop %v630
    %v632 = vsub.f32 %v631, 1.0
    %v633 = vsel %vm629, %v626, %v632
    %v634 = vld [vmem:[#allocation15] sm:$0x1]
    %v636 = vlaneseq
    %v637 = vshrl.u32 %v636, 7
    %v638 = vsub.s32 0, %v637
    %v639 = vrot.slane %v634, %v638
    %v641 = vmul.f32 %v633, %v639
    %v642 = vsel %vm377, %v641, 0.0
    %643 = vadd.xlane.f32.xlu0 %v642
    %v644 = vpop.xlane.xlu0 %643
    %v645 = vld [vmem:[#allocation2] sm:$0x1]
    %v647 = vlaneseq
    %v648 = vshrl.u32 %v647, 7
    %v649 = vsub.s32 0, %v648
    %v650 = vrot.slane %v645, %v649
    %v652 = vadd.f32 %v644, %v650
    %v653 = vld [vmem:[%s19] sm:$0xff]
    %v654 = vld [vmem:[%s19 + $0x8] sm:$0xff]
    %v655 = vld [vmem:[%s19 + $0x10] sm:$0xff]
    %v656 = vld [vmem:[%s19 + $0x18] sm:$0xff]
    %v657 = vld [vmem:[#allocation17] sm:$0x1]
    %659 = vset.pattern.permute.xlu0 0
    %660 = vperm.xlu0 %659, %v652
    %v661 = vpop.permute.xlu0 %660
    %v664 = vlaneseq
    %v665 = vshrl.u32 %v664, 7
    %v666 = vsub.s32 0, %v665
    %v667 = vrot.slane %v657, %v666
    %v669 = vmul.f32 %v661, %v667
    %670 = vmatprep.subr.mxu0 0.0
    %671 = vmatpush1.msra.mxu0 %v653
    %672 = vmatprep.subr.mxu0 0.0
    %673 = vmatpush1.msra.mxu0 %v654
    %674 = vmatprep.subr.mxu0 0.0
    %675 = vmatpush1.msra.mxu0 %v655
    %676 = vmatprep.subr.mxu0 0.0
    %677 = vmatpush1.msra.mxu0 %v656
    %678 = vmatprep.subr.mxu0 0.0
    %679 = vmatpush1.msra.mxu0 0.0
    %680 = vmatprep.subr.mxu0 0.0
    %681 = vmatpush1.msra.mxu0 0.0
    %682 = vmatprep.subr.mxu0 0.0
    %683 = vmatpush1.msra.mxu0 0.0
    %684 = vmatprep.subr.mxu0 0.0
    %685 = vmatpush1.msra.mxu0 0.0
    %686 = vmatprep.subr.mxu0 0.0
    %687 = vmatpush1.msra.mxu0 0.0
    %688 = vmatprep.subr.mxu0 0.0
    %689 = vmatpush1.msra.mxu0 0.0
    %690 = vmatprep.subr.mxu0 0.0
    %691 = vmatpush1.msra.mxu0 0.0
    %692 = vmatprep.subr.mxu0 0.0
    %693 = vmatpush1.msra.mxu0 0.0
    %694 = vmatprep.subr.mxu0 0.0
    %695 = vmatpush1.msra.mxu0 0.0
    %696 = vmatprep.subr.mxu0 0.0
    %697 = vmatpush1.msra.mxu0 0.0
    %698 = vmatprep.subr.mxu0 0.0
    %699 = vmatpush1.msra.mxu0 0.0
    %700 = vmatprep.subr.mxu0 0.0
    %701 = vmatpush1.msra.mxu0 0.0
    %702 = vmatprep.subr.mxu0 0.0
    %703 = vmatpush1.msra.mxu0 0.0
    %704 = vmatprep.subr.mxu0 0.0
    %705 = vmatpush1.msra.mxu0 0.0
    %706 = vmatprep.subr.mxu0 0.0
    %707 = vmatpush1.msra.mxu0 0.0
    %708 = vmatprep.subr.mxu0 0.0
    %709 = vmatpush1.msra.mxu0 0.0
    %710 = vmatprep.subr.mxu0 0.0
    %711 = vmatpush1.msra.mxu0 0.0
    %712 = vmatprep.subr.mxu0 0.0
    %713 = vmatpush1.msra.mxu0 0.0
    %714 = vmatprep.subr.mxu0 0.0
    %715 = vmatpush1.msra.mxu0 0.0
    %716 = vmatprep.subr.mxu0 0.0
    %717 = vmatpush1.msra.mxu0 0.0
    %718 = vmatprep.subr.mxu0 0.0
    %719 = vmatpush1.msra.mxu0 0.0
    %720 = vmatprep.subr.mxu0 0.0
    %721 = vmatpush1.msra.mxu0 0.0
    %722 = vmatprep.subr.mxu0 0.0
    %723 = vmatpush1.msra.mxu0 0.0
    %724 = vmatprep.subr.mxu0 0.0
    %725 = vmatpush1.msra.mxu0 0.0
    %726 = vmatprep.subr.mxu0 0.0
    %727 = vmatpush1.msra.mxu0 0.0
    %728 = vmatprep.subr.mxu0 0.0
    %729 = vmatpush1.msra.mxu0 0.0
    %730 = vmatprep.subr.mxu0 0.0
    %731 = vmatpush1.msra.mxu0 0.0
    %732 = vmatprep.subr.mxu0 0.0
    %733 = vmatpush1.msra.mxu0 0.0
    %734 = vmatprep.mubr.f32.mxu0 0.0
    %735 = vmatmul.mubr.f32.gmra.mrb[0].mxu0 %v379
    %v736 = vpop.f32.mrb[0].mxu0
    %v737 = vadd.f32 %v669, %v736
    %v738 = vpop.f32.mrb[0].mxu0
    %739 = vdwg.mxu0
    %v740 = vld [vmem:[#allocation18] sm:$0x1]
    %v742 = vlaneseq
    %v743 = vshrl.u32 %v742, 7
    %v744 = vsub.s32 0, %v743
    %v745 = vrot.slane %v740, %v744
    %v747 = vadd.f32 %v737, %v745
    %vm748 = vcmp.gt.f32.partialorder %v747, 0.0
    %v749 = vmul.f32 %v747, 1.442695
    %v750 = vpow.pop %v749
    %v751 = vsub.f32 %v750, 1.0
    %v752 = vsel %vm748, %v747, %v751
    %v753 = vld [vmem:[#allocation20] sm:$0xff]
    %v754 = vld [vmem:[#allocation20 + $0x8] sm:$0xff]
    %v755 = vld [vmem:[#allocation20 + $0x10] sm:$0xff]
    %v756 = vld [vmem:[#allocation20 + $0x18] sm:$0xff]
    %v757 = vld [vmem:[#allocation21] sm:$0x1]
    %v759 = vlaneseq
    %v760 = vshrl.u32 %v759, 7
    %v761 = vsub.s32 0, %v760
    %v762 = vrot.slane %v757, %v761
    %v765 = vsel %vm377, %v752, 0
    %767 = vmatprep.subr.mxu0 0.0
    %768 = vmatpush1.msra.mxu0 %v753
    %769 = vmatprep.subr.mxu0 0.0
    %770 = vmatpush1.msra.mxu0 %v754
    %771 = vmatprep.subr.mxu0 0.0
    %772 = vmatpush1.msra.mxu0 %v755
    %773 = vmatprep.subr.mxu0 0.0
    %774 = vmatpush1.msra.mxu0 %v756
    %775 = vmatprep.subr.mxu0 0.0
    %776 = vmatpush1.msra.mxu0 0.0
    %777 = vmatprep.subr.mxu0 0.0
    %778 = vmatpush1.msra.mxu0 0.0
    %779 = vmatprep.subr.mxu0 0.0
    %780 = vmatpush1.msra.mxu0 0.0
    %781 = vmatprep.subr.mxu0 0.0
    %782 = vmatpush1.msra.mxu0 0.0
    %783 = vmatprep.subr.mxu0 0.0
    %784 = vmatpush1.msra.mxu0 0.0
    %785 = vmatprep.subr.mxu0 0.0
    %786 = vmatpush1.msra.mxu0 0.0
    %787 = vmatprep.subr.mxu0 0.0
    %788 = vmatpush1.msra.mxu0 0.0
    %789 = vmatprep.subr.mxu0 0.0
    %790 = vmatpush1.msra.mxu0 0.0
    %791 = vmatprep.subr.mxu0 0.0
    %792 = vmatpush1.msra.mxu0 0.0
    %793 = vmatprep.subr.mxu0 0.0
    %794 = vmatpush1.msra.mxu0 0.0
    %795 = vmatprep.subr.mxu0 0.0
    %796 = vmatpush1.msra.mxu0 0.0
    %797 = vmatprep.subr.mxu0 0.0
    %798 = vmatpush1.msra.mxu0 0.0
    %799 = vmatprep.subr.mxu0 0.0
    %800 = vmatpush1.msra.mxu0 0.0
    %801 = vmatprep.subr.mxu0 0.0
    %802 = vmatpush1.msra.mxu0 0.0
    %803 = vmatprep.subr.mxu0 0.0
    %804 = vmatpush1.msra.mxu0 0.0
    %805 = vmatprep.subr.mxu0 0.0
    %806 = vmatpush1.msra.mxu0 0.0
    %807 = vmatprep.subr.mxu0 0.0
    %808 = vmatpush1.msra.mxu0 0.0
    %809 = vmatprep.subr.mxu0 0.0
    %810 = vmatpush1.msra.mxu0 0.0
    %811 = vmatprep.subr.mxu0 0.0
    %812 = vmatpush1.msra.mxu0 0.0
    %813 = vmatprep.subr.mxu0 0.0
    %814 = vmatpush1.msra.mxu0 0.0
    %815 = vmatprep.subr.mxu0 0.0
    %816 = vmatpush1.msra.mxu0 0.0
    %817 = vmatprep.subr.mxu0 0.0
    %818 = vmatpush1.msra.mxu0 0.0
    %819 = vmatprep.subr.mxu0 0.0
    %820 = vmatpush1.msra.mxu0 0.0
    %821 = vmatprep.subr.mxu0 0.0
    %822 = vmatpush1.msra.mxu0 0.0
    %823 = vmatprep.subr.mxu0 0.0
    %824 = vmatpush1.msra.mxu0 0.0
    %825 = vmatprep.subr.mxu0 0.0
    %826 = vmatpush1.msra.mxu0 0.0
    %827 = vmatprep.subr.mxu0 0.0
    %828 = vmatpush1.msra.mxu0 0.0
    %829 = vmatprep.subr.mxu0 0.0
    %830 = vmatpush1.msra.mxu0 0.0
    %831 = vmatprep.mubr.f32.mxu0 0.0
    %832 = vmatmul.mubr.f32.gmra.mrb[0].mxu0 %v765
    %v833 = vpop.f32.mrb[0].mxu0
    %v834 = vadd.f32 %v762, %v833
    %v835 = vpop.f32.mrb[0].mxu0
    %836 = vdwg.mxu0
    %vm837 = vcmp.gt.f32.partialorder %v834, 0.0
    %v838 = vmul.f32 %v834, 1.442695
    %v839 = vpow.pop %v838
    %v840 = vsub.f32 %v839, 1.0
    %v841 = vsel %vm837, %v834, %v840
    %v842 = vld [vmem:[#allocation23] sm:$0xff]
    %v843 = vld [vmem:[#allocation23 + $0x8] sm:$0xff]
    %v844 = vld [vmem:[#allocation23 + $0x10] sm:$0xff]
    %v845 = vld [vmem:[#allocation23 + $0x18] sm:$0xff]
    %v846 = vld [vmem:[#allocation24] sm:$0x1]
    %v848 = vlaneseq
    %v849 = vshrl.u32 %v848, 7
    %v850 = vsub.s32 0, %v849
    %v851 = vrot.slane %v846, %v850
    %v854 = vsel %vm377, %v841, 0
    %856 = vmatprep.subr.mxu0 0.0
    %857 = vmatpush1.msra.mxu0 %v842
    %858 = vmatprep.subr.mxu0 0.0
    %859 = vmatpush1.msra.mxu0 %v843
    %860 = vmatprep.subr.mxu0 0.0
    %861 = vmatpush1.msra.mxu0 %v844
    %862 = vmatprep.subr.mxu0 0.0
    %863 = vmatpush1.msra.mxu0 %v845
    %864 = vmatprep.subr.mxu0 0.0
    %865 = vmatpush1.msra.mxu0 0.0
    %866 = vmatprep.subr.mxu0 0.0
    %867 = vmatpush1.msra.mxu0 0.0
    %868 = vmatprep.subr.mxu0 0.0
    %869 = vmatpush1.msra.mxu0 0.0
    %870 = vmatprep.subr.mxu0 0.0
    %871 = vmatpush1.msra.mxu0 0.0
    %872 = vmatprep.subr.mxu0 0.0
    %873 = vmatpush1.msra.mxu0 0.0
    %874 = vmatprep.subr.mxu0 0.0
    %875 = vmatpush1.msra.mxu0 0.0
    %876 = vmatprep.subr.mxu0 0.0
    %877 = vmatpush1.msra.mxu0 0.0
    %878 = vmatprep.subr.mxu0 0.0
    %879 = vmatpush1.msra.mxu0 0.0
    %880 = vmatprep.subr.mxu0 0.0
    %881 = vmatpush1.msra.mxu0 0.0
    %882 = vmatprep.subr.mxu0 0.0
    %883 = vmatpush1.msra.mxu0 0.0
    %884 = vmatprep.subr.mxu0 0.0
    %885 = vmatpush1.msra.mxu0 0.0
    %886 = vmatprep.subr.mxu0 0.0
    %887 = vmatpush1.msra.mxu0 0.0
    %888 = vmatprep.subr.mxu0 0.0
    %889 = vmatpush1.msra.mxu0 0.0
    %890 = vmatprep.subr.mxu0 0.0
    %891 = vmatpush1.msra.mxu0 0.0
    %892 = vmatprep.subr.mxu0 0.0
    %893 = vmatpush1.msra.mxu0 0.0
    %894 = vmatprep.subr.mxu0 0.0
    %895 = vmatpush1.msra.mxu0 0.0
    %896 = vmatprep.subr.mxu0 0.0
    %897 = vmatpush1.msra.mxu0 0.0
    %898 = vmatprep.subr.mxu0 0.0
    %899 = vmatpush1.msra.mxu0 0.0
    %900 = vmatprep.subr.mxu0 0.0
    %901 = vmatpush1.msra.mxu0 0.0
    %902 = vmatprep.subr.mxu0 0.0
    %903 = vmatpush1.msra.mxu0 0.0
    %904 = vmatprep.subr.mxu0 0.0
    %905 = vmatpush1.msra.mxu0 0.0
    %906 = vmatprep.subr.mxu0 0.0
    %907 = vmatpush1.msra.mxu0 0.0
    %908 = vmatprep.subr.mxu0 0.0
    %909 = vmatpush1.msra.mxu0 0.0
    %910 = vmatprep.subr.mxu0 0.0
    %911 = vmatpush1.msra.mxu0 0.0
    %912 = vmatprep.subr.mxu0 0.0
    %913 = vmatpush1.msra.mxu0 0.0
    %914 = vmatprep.subr.mxu0 0.0
    %915 = vmatpush1.msra.mxu0 0.0
    %916 = vmatprep.subr.mxu0 0.0
    %917 = vmatpush1.msra.mxu0 0.0
    %918 = vmatprep.subr.mxu0 0.0
    %919 = vmatpush1.msra.mxu0 0.0
    %920 = vmatprep.mubr.f32.mxu0 0.0
    %921 = vmatmul.mubr.f32.gmra.mrb[0].mxu0 %v854
    %v922 = vpop.f32.mrb[0].mxu0
    %v923 = vadd.f32 %v851, %v922
    %v924 = vpop.f32.mrb[0].mxu0
    %925 = vdwg.mxu0
    %vm926 = vcmp.gt.f32.partialorder %v923, 0.0
    %v927 = vmul.f32 %v923, 1.442695
    %v928 = vpow.pop %v927
    %v929 = vsub.f32 %v928, 1.0
    %v930 = vsel %vm926, %v923, %v929
    %v931 = vld [vmem:[#allocation26] sm:$0xff]
    %v932 = vld [vmem:[#allocation26 + $0x8] sm:$0xff]
    %v933 = vld [vmem:[#allocation26 + $0x10] sm:$0xff]
    %v934 = vld [vmem:[#allocation26 + $0x18] sm:$0xff]
    %v935 = vld [vmem:[#allocation27] sm:$0x1]
    %v937 = vlaneseq
    %v938 = vshrl.u32 %v937, 7
    %v939 = vsub.s32 0, %v938
    %v940 = vrot.slane %v935, %v939
    %v942 = vmul.f32 %v661, %v940
    %v944 = vsel %vm377, %v930, 0
    %946 = vmatprep.subr.mxu0 0.0
    %947 = vmatpush1.msra.mxu0 %v931
    %948 = vmatprep.subr.mxu0 0.0
    %949 = vmatpush1.msra.mxu0 %v932
    %950 = vmatprep.subr.mxu0 0.0
    %951 = vmatpush1.msra.mxu0 %v933
    %952 = vmatprep.subr.mxu0 0.0
    %953 = vmatpush1.msra.mxu0 %v934
    %954 = vmatprep.subr.mxu0 0.0
    %955 = vmatpush1.msra.mxu0 0.0
    %956 = vmatprep.subr.mxu0 0.0
    %957 = vmatpush1.msra.mxu0 0.0
    %958 = vmatprep.subr.mxu0 0.0
    %959 = vmatpush1.msra.mxu0 0.0
    %960 = vmatprep.subr.mxu0 0.0
    %961 = vmatpush1.msra.mxu0 0.0
    %962 = vmatprep.subr.mxu0 0.0
    %963 = vmatpush1.msra.mxu0 0.0
    %964 = vmatprep.subr.mxu0 0.0
    %965 = vmatpush1.msra.mxu0 0.0
    %966 = vmatprep.subr.mxu0 0.0
    %967 = vmatpush1.msra.mxu0 0.0
    %968 = vmatprep.subr.mxu0 0.0
    %969 = vmatpush1.msra.mxu0 0.0
    %970 = vmatprep.subr.mxu0 0.0
    %971 = vmatpush1.msra.mxu0 0.0
    %972 = vmatprep.subr.mxu0 0.0
    %973 = vmatpush1.msra.mxu0 0.0
    %974 = vmatprep.subr.mxu0 0.0
    %975 = vmatpush1.msra.mxu0 0.0
    %976 = vmatprep.subr.mxu0 0.0
    %977 = vmatpush1.msra.mxu0 0.0
    %978 = vmatprep.subr.mxu0 0.0
    %979 = vmatpush1.msra.mxu0 0.0
    %980 = vmatprep.subr.mxu0 0.0
    %981 = vmatpush1.msra.mxu0 0.0
    %982 = vmatprep.subr.mxu0 0.0
    %983 = vmatpush1.msra.mxu0 0.0
    %984 = vmatprep.subr.mxu0 0.0
    %985 = vmatpush1.msra.mxu0 0.0
    %986 = vmatprep.subr.mxu0 0.0
    %987 = vmatpush1.msra.mxu0 0.0
    %988 = vmatprep.subr.mxu0 0.0
    %989 = vmatpush1.msra.mxu0 0.0
    %990 = vmatprep.subr.mxu0 0.0
    %991 = vmatpush1.msra.mxu0 0.0
    %992 = vmatprep.subr.mxu0 0.0
    %993 = vmatpush1.msra.mxu0 0.0
    %994 = vmatprep.subr.mxu0 0.0
    %995 = vmatpush1.msra.mxu0 0.0
    %996 = vmatprep.subr.mxu0 0.0
    %997 = vmatpush1.msra.mxu0 0.0
    %998 = vmatprep.subr.mxu0 0.0
    %999 = vmatpush1.msra.mxu0 0.0
    %1000 = vmatprep.subr.mxu0 0.0
    %1001 = vmatpush1.msra.mxu0 0.0
    %1002 = vmatprep.subr.mxu0 0.0
    %1003 = vmatpush1.msra.mxu0 0.0
    %1004 = vmatprep.subr.mxu0 0.0
    %1005 = vmatpush1.msra.mxu0 0.0
    %1006 = vmatprep.subr.mxu0 0.0
    %1007 = vmatpush1.msra.mxu0 0.0
    %1008 = vmatprep.subr.mxu0 0.0
    %1009 = vmatpush1.msra.mxu0 0.0
    %1010 = vmatprep.mubr.f32.mxu0 0.0
    %1011 = vmatmul.mubr.f32.gmra.mrb[0].mxu0 %v944
    %v1012 = vpop.f32.mrb[0].mxu0
    %v1013 = vadd.f32 %v942, %v1012
    %v1014 = vpop.f32.mrb[0].mxu0
    %1015 = vdwg.mxu0
    %v1016 = vld [vmem:[#allocation29] sm:$0x1]
    %v1018 = vlaneseq
    %v1019 = vshrl.u32 %v1018, 7
    %v1020 = vsub.s32 0, %v1019
    %v1021 = vrot.slane %v1016, %v1020
    %v1023 = vadd.f32 %v1013, %v1021
    %vm1024 = vcmp.gt.f32.partialorder %v1023, 0.0
    %v1025 = vmul.f32 %v1023, 1.442695
    %v1026 = vpow.pop %v1025
    %v1027 = vsub.f32 %v1026, 1.0
    %v1028 = vsel %vm1024, %v1023, %v1027
    %v1029 = vld [vmem:[%s39] sm:$0xff]
    %v1030 = vld [vmem:[%s39 + $0x8] sm:$0xff]
    %v1031 = vld [vmem:[%s39 + $0x10] sm:$0xff]
    %v1032 = vld [vmem:[%s39 + $0x18] sm:$0xff]
    %v1033 = vld [vmem:[%s41] sm:$0x1]
    %v1035 = vlaneseq
    %v1036 = vshrl.u32 %v1035, 7
    %v1037 = vsub.s32 0, %v1036
    %v1038 = vrot.slane %v1033, %v1037
    %v1041 = vsel %vm377, %v1028, 0
    %1043 = vmatprep.subr.mxu0 0.0
    %1044 = vmatpush1.msra.mxu0 %v1029
    %1045 = vmatprep.subr.mxu0 0.0
    %1046 = vmatpush1.msra.mxu0 %v1030
    %1047 = vmatprep.subr.mxu0 0.0
    %1048 = vmatpush1.msra.mxu0 %v1031
    %1049 = vmatprep.subr.mxu0 0.0
    %1050 = vmatpush1.msra.mxu0 %v1032
    %1051 = vmatprep.subr.mxu0 0.0
    %1052 = vmatpush1.msra.mxu0 0.0
    %1053 = vmatprep.subr.mxu0 0.0
    %1054 = vmatpush1.msra.mxu0 0.0
    %1055 = vmatprep.subr.mxu0 0.0
    %1056 = vmatpush1.msra.mxu0 0.0
    %1057 = vmatprep.subr.mxu0 0.0
    %1058 = vmatpush1.msra.mxu0 0.0
    %1059 = vmatprep.subr.mxu0 0.0
    %1060 = vmatpush1.msra.mxu0 0.0
    %1061 = vmatprep.subr.mxu0 0.0
    %1062 = vmatpush1.msra.mxu0 0.0
    %1063 = vmatprep.subr.mxu0 0.0
    %1064 = vmatpush1.msra.mxu0 0.0
    %1065 = vmatprep.subr.mxu0 0.0
    %1066 = vmatpush1.msra.mxu0 0.0
    %1067 = vmatprep.subr.mxu0 0.0
    %1068 = vmatpush1.msra.mxu0 0.0
    %1069 = vmatprep.subr.mxu0 0.0
    %1070 = vmatpush1.msra.mxu0 0.0
    %1071 = vmatprep.subr.mxu0 0.0
    %1072 = vmatpush1.msra.mxu0 0.0
    %1073 = vmatprep.subr.mxu0 0.0
    %1074 = vmatpush1.msra.mxu0 0.0
    %1075 = vmatprep.subr.mxu0 0.0
    %1076 = vmatpush1.msra.mxu0 0.0
    %1077 = vmatprep.subr.mxu0 0.0
    %1078 = vmatpush1.msra.mxu0 0.0
    %1079 = vmatprep.subr.mxu0 0.0
    %1080 = vmatpush1.msra.mxu0 0.0
    %1081 = vmatprep.subr.mxu0 0.0
    %1082 = vmatpush1.msra.mxu0 0.0
    %1083 = vmatprep.subr.mxu0 0.0
    %1084 = vmatpush1.msra.mxu0 0.0
    %1085 = vmatprep.subr.mxu0 0.0
    %1086 = vmatpush1.msra.mxu0 0.0
    %1087 = vmatprep.subr.mxu0 0.0
    %1088 = vmatpush1.msra.mxu0 0.0
    %1089 = vmatprep.subr.mxu0 0.0
    %1090 = vmatpush1.msra.mxu0 0.0
    %1091 = vmatprep.subr.mxu0 0.0
    %1092 = vmatpush1.msra.mxu0 0.0
    %1093 = vmatprep.subr.mxu0 0.0
    %1094 = vmatpush1.msra.mxu0 0.0
    %1095 = vmatprep.subr.mxu0 0.0
    %1096 = vmatpush1.msra.mxu0 0.0
    %1097 = vmatprep.subr.mxu0 0.0
    %1098 = vmatpush1.msra.mxu0 0.0
    %1099 = vmatprep.subr.mxu0 0.0
    %1100 = vmatpush1.msra.mxu0 0.0
    %1101 = vmatprep.subr.mxu0 0.0
    %1102 = vmatpush1.msra.mxu0 0.0
    %1103 = vmatprep.subr.mxu0 0.0
    %1104 = vmatpush1.msra.mxu0 0.0
    %1105 = vmatprep.subr.mxu0 0.0
    %1106 = vmatpush1.msra.mxu0 0.0
    %1107 = vmatprep.mubr.f32.mxu0 0.0
    %1108 = vmatmul.mubr.f32.gmra.mrb[0].mxu0 %v1041
    %v1109 = vpop.f32.mrb[0].mxu0
    %v1110 = vadd.f32 %v1038, %v1109
    %v1111 = vpop.f32.mrb[0].mxu0
    %1112 = vdwg.mxu0
    %vm1113 = vcmp.gt.f32.partialorder %v1110, 0.0
    %v1114 = vmul.f32 %v1110, 1.442695
    %v1115 = vpow.pop %v1114
    %v1116 = vsub.f32 %v1115, 1.0
    %v1117 = vsel %vm1113, %v1110, %v1116
    %v1118 = vld [vmem:[#allocation30] sm:$0xff]
    %v1119 = vld [vmem:[#allocation30 + $0x8] sm:$0xff]
    %v1120 = vld [vmem:[#allocation30 + $0x10] sm:$0xff]
    %v1121 = vld [vmem:[#allocation30 + $0x18] sm:$0xff]
    %v1122 = vld [vmem:[%s45] sm:$0x1]
    %v1124 = vlaneseq
    %v1125 = vshrl.u32 %v1124, 7
    %v1126 = vsub.s32 0, %v1125
    %v1127 = vrot.slane %v1122, %v1126
    %v1130 = vsel %vm377, %v1117, 0
    %1132 = vmatprep.subr.mxu0 0.0
    %1133 = vmatpush1.msra.mxu0 %v1118
    %1134 = vmatprep.subr.mxu0 0.0
    %1135 = vmatpush1.msra.mxu0 %v1119
    %1136 = vmatprep.subr.mxu0 0.0
    %1137 = vmatpush1.msra.mxu0 %v1120
    %1138 = vmatprep.subr.mxu0 0.0
    %1139 = vmatpush1.msra.mxu0 %v1121
    %1140 = vmatprep.subr.mxu0 0.0
    %1141 = vmatpush1.msra.mxu0 0.0
    %1142 = vmatprep.subr.mxu0 0.0
    %1143 = vmatpush1.msra.mxu0 0.0
    %1144 = vmatprep.subr.mxu0 0.0
    %1145 = vmatpush1.msra.mxu0 0.0
    %1146 = vmatprep.subr.mxu0 0.0
    %1147 = vmatpush1.msra.mxu0 0.0
    %1148 = vmatprep.subr.mxu0 0.0
    %1149 = vmatpush1.msra.mxu0 0.0
    %1150 = vmatprep.subr.mxu0 0.0
    %1151 = vmatpush1.msra.mxu0 0.0
    %1152 = vmatprep.subr.mxu0 0.0
    %1153 = vmatpush1.msra.mxu0 0.0
    %1154 = vmatprep.subr.mxu0 0.0
    %1155 = vmatpush1.msra.mxu0 0.0
    %1156 = vmatprep.subr.mxu0 0.0
    %1157 = vmatpush1.msra.mxu0 0.0
    %1158 = vmatprep.subr.mxu0 0.0
    %1159 = vmatpush1.msra.mxu0 0.0
    %1160 = vmatprep.subr.mxu0 0.0
    %1161 = vmatpush1.msra.mxu0 0.0
    %1162 = vmatprep.subr.mxu0 0.0
    %1163 = vmatpush1.msra.mxu0 0.0
    %1164 = vmatprep.subr.mxu0 0.0
    %1165 = vmatpush1.msra.mxu0 0.0
    %1166 = vmatprep.subr.mxu0 0.0
    %1167 = vmatpush1.msra.mxu0 0.0
    %1168 = vmatprep.subr.mxu0 0.0
    %1169 = vmatpush1.msra.mxu0 0.0
    %1170 = vmatprep.subr.mxu0 0.0
    %1171 = vmatpush1.msra.mxu0 0.0
    %1172 = vmatprep.subr.mxu0 0.0
    %1173 = vmatpush1.msra.mxu0 0.0
    %1174 = vmatprep.subr.mxu0 0.0
    %1175 = vmatpush1.msra.mxu0 0.0
    %1176 = vmatprep.subr.mxu0 0.0
    %1177 = vmatpush1.msra.mxu0 0.0
    %1178 = vmatprep.subr.mxu0 0.0
    %1179 = vmatpush1.msra.mxu0 0.0
    %1180 = vmatprep.subr.mxu0 0.0
    %1181 = vmatpush1.msra.mxu0 0.0
    %1182 = vmatprep.subr.mxu0 0.0
    %1183 = vmatpush1.msra.mxu0 0.0
    %1184 = vmatprep.subr.mxu0 0.0
    %1185 = vmatpush1.msra.mxu0 0.0
    %1186 = vmatprep.subr.mxu0 0.0
    %1187 = vmatpush1.msra.mxu0 0.0
    %1188 = vmatprep.subr.mxu0 0.0
    %1189 = vmatpush1.msra.mxu0 0.0
    %1190 = vmatprep.subr.mxu0 0.0
    %1191 = vmatpush1.msra.mxu0 0.0
    %1192 = vmatprep.subr.mxu0 0.0
    %1193 = vmatpush1.msra.mxu0 0.0
    %1194 = vmatprep.subr.mxu0 0.0
    %1195 = vmatpush1.msra.mxu0 0.0
    %1196 = vmatprep.mubr.f32.mxu0 0.0
    %1197 = vmatmul.mubr.f32.gmra.mrb[0].mxu0 %v1130
    %v1198 = vpop.f32.mrb[0].mxu0
    %v1199 = vadd.f32 %v1127, %v1198
    %v1200 = vpop.f32.mrb[0].mxu0
    %1201 = vdwg.mxu0
    %vm1202 = vcmp.gt.f32.partialorder %v1199, 0.0
    %v1203 = vmul.f32 %v1199, 1.442695
    %v1204 = vpow.pop %v1203
    %v1205 = vsub.f32 %v1204, 1.0
    %v1206 = vsel %vm1202, %v1199, %v1205
    %v1207 = vld [vmem:[%s47] sm:$0x1]
    %v1208 = vlaneseq
    %v1209 = vshrl.u32 %v1208, 7
    %v1210 = vsub.s32 0, %v1209
    %v1211 = vrot.slane %v1207, %v1210
    %v1212 = vmul.f32 %v1206, %v1211
    %v1213 = vsel %vm377, %v1212, 0.0
    %1214 = vadd.xlane.f32.xlu0 %v1213
    %v1215 = vpop.xlane.xlu0 %1214
    %v1216 = vld [vmem:[%s49] sm:$0x1]
    %v1218 = vlaneseq
    %v1219 = vshrl.u32 %v1218, 7
    %v1220 = vsub.s32 0, %v1219
    %v1221 = vrot.slane %v1216, %v1220
    %v1223 = vadd.f32 %v1215, %v1221
    %v1224 = vld [vmem:[%s47 + $0x1] sm:$0x1]
    %v1225 = vlaneseq
    %v1226 = vshrl.u32 %v1225, 7
    %v1227 = vsub.s32 0, %v1226
    %v1228 = vrot.slane %v1224, %v1227
    %v1229 = vmul.f32 %v1206, %v1228
    %v1230 = vsel %vm377, %v1229, 0.0
    %1231 = vadd.xlane.f32.xlu0 %v1230
    %v1232 = vpop.xlane.xlu0 %1231
    %v1233 = vadd.f32 %v1232, %v1221
    %v1234 = vld [vmem:[#allocation32] sm:$0xff]
    %v1235 = vld [vmem:[#allocation32 + $0x8] sm:$0xff]
    %v1236 = vld [vmem:[#allocation32 + $0x10] sm:$0xff]
    %v1237 = vld [vmem:[#allocation32 + $0x18] sm:$0xff]
    %v1238 = vld [vmem:[%s53] sm:$0x1]
    %v1240 = vlaneseq
    %v1241 = vshrl.u32 %v1240, 7
    %v1242 = vsub.s32 0, %v1241
    %v1243 = vrot.slane %v1238, %v1242
    %v1245 = vmul.f32 %v661, %v1243
    %1246 = vmatprep.subr.mxu0 0.0
    %1247 = vmatpush1.msra.mxu0 %v1234
    %1248 = vmatprep.subr.mxu0 0.0
    %1249 = vmatpush1.msra.mxu0 %v1235
    %1250 = vmatprep.subr.mxu0 0.0
    %1251 = vmatpush1.msra.mxu0 %v1236
    %1252 = vmatprep.subr.mxu0 0.0
    %1253 = vmatpush1.msra.mxu0 %v1237
    %1254 = vmatprep.subr.mxu0 0.0
    %1255 = vmatpush1.msra.mxu0 0.0
    %1256 = vmatprep.subr.mxu0 0.0
    %1257 = vmatpush1.msra.mxu0 0.0
    %1258 = vmatprep.subr.mxu0 0.0
    %1259 = vmatpush1.msra.mxu0 0.0
    %1260 = vmatprep.subr.mxu0 0.0
    %1261 = vmatpush1.msra.mxu0 0.0
    %1262 = vmatprep.subr.mxu0 0.0
    %1263 = vmatpush1.msra.mxu0 0.0
    %1264 = vmatprep.subr.mxu0 0.0
    %1265 = vmatpush1.msra.mxu0 0.0
    %1266 = vmatprep.subr.mxu0 0.0
    %1267 = vmatpush1.msra.mxu0 0.0
    %1268 = vmatprep.subr.mxu0 0.0
    %1269 = vmatpush1.msra.mxu0 0.0
    %1270 = vmatprep.subr.mxu0 0.0
    %1271 = vmatpush1.msra.mxu0 0.0
    %1272 = vmatprep.subr.mxu0 0.0
    %1273 = vmatpush1.msra.mxu0 0.0
    %1274 = vmatprep.subr.mxu0 0.0
    %1275 = vmatpush1.msra.mxu0 0.0
    %1276 = vmatprep.subr.mxu0 0.0
    %1277 = vmatpush1.msra.mxu0 0.0
    %1278 = vmatprep.subr.mxu0 0.0
    %1279 = vmatpush1.msra.mxu0 0.0
    %1280 = vmatprep.subr.mxu0 0.0
    %1281 = vmatpush1.msra.mxu0 0.0
    %1282 = vmatprep.subr.mxu0 0.0
    %1283 = vmatpush1.msra.mxu0 0.0
    %1284 = vmatprep.subr.mxu0 0.0
    %1285 = vmatpush1.msra.mxu0 0.0
    %1286 = vmatprep.subr.mxu0 0.0
    %1287 = vmatpush1.msra.mxu0 0.0
    %1288 = vmatprep.subr.mxu0 0.0
    %1289 = vmatpush1.msra.mxu0 0.0
    %1290 = vmatprep.subr.mxu0 0.0
    %1291 = vmatpush1.msra.mxu0 0.0
    %1292 = vmatprep.subr.mxu0 0.0
    %1293 = vmatpush1.msra.mxu0 0.0
    %1294 = vmatprep.subr.mxu0 0.0
    %1295 = vmatpush1.msra.mxu0 0.0
    %1296 = vmatprep.subr.mxu0 0.0
    %1297 = vmatpush1.msra.mxu0 0.0
    %1298 = vmatprep.subr.mxu0 0.0
    %1299 = vmatpush1.msra.mxu0 0.0
    %1300 = vmatprep.subr.mxu0 0.0
    %1301 = vmatpush1.msra.mxu0 0.0
    %1302 = vmatprep.subr.mxu0 0.0
    %1303 = vmatpush1.msra.mxu0 0.0
    %1304 = vmatprep.subr.mxu0 0.0
    %1305 = vmatpush1.msra.mxu0 0.0
    %1306 = vmatprep.subr.mxu0 0.0
    %1307 = vmatpush1.msra.mxu0 0.0
    %1308 = vmatprep.subr.mxu0 0.0
    %1309 = vmatpush1.msra.mxu0 0.0
    %1310 = vmatprep.mubr.f32.mxu0 0.0
    %1311 = vmatmul.mubr.f32.gmra.mrb[0].mxu0 %v944
    %v1312 = vpop.f32.mrb[0].mxu0
    %v1313 = vadd.f32 %v1245, %v1312
    %v1314 = vpop.f32.mrb[0].mxu0
    %1315 = vdwg.mxu0
    %v1316 = vld [vmem:[%s55] sm:$0x1]
    %1318 = vset.pattern.permute.xlu0 0
    %1319 = vperm.xlu0 %1318, %v1223
    %v1320 = vpop.permute.xlu0 %1319
    %v1322 = vlaneseq
    %v1323 = vshrl.u32 %v1322, 7
    %v1324 = vsub.s32 0, %v1323
    %v1325 = vrot.slane %v1316, %v1324
    %v1326 = vmul.f32 %v1320, %v1325
    %v1327 = vadd.f32 %v1313, %v1326
    %v1328 = vld [vmem:[%s55 + $0x1] sm:$0x1]
    %1330 = vset.pattern.permute.xlu0 1
    %1331 = vperm.xlu0 %1330, %v1233
    %v1332 = vpop.permute.xlu0 %1331
    %v1334 = vlaneseq
    %v1335 = vshrl.u32 %v1334, 7
    %v1336 = vsub.s32 0, %v1335
    %v1337 = vrot.slane %v1328, %v1336
    %v1338 = vmul.f32 %v1332, %v1337
    %v1339 = vadd.f32 %v1327, %v1338
    %v1340 = vld [vmem:[%s57] sm:$0x1]
    %v1342 = vlaneseq
    %v1343 = vshrl.u32 %v1342, 7
    %v1344 = vsub.s32 0, %v1343
    %v1345 = vrot.slane %v1340, %v1344
    %v1347 = vadd.f32 %v1339, %v1345
    %1348 = vst.msk [vmem:[#allocation33] sm:$0xff] %vm377, %v1347
    %vm1349 = vcmask 7168
    %1350 = vst.msk [vmem:[%s61] sm:$0xff] %vm1349, %v1223
    %vm1351 = vcmask 15368
    %1352 = vst.msk [vmem:[%s61] sm:$0xff] %vm1351, %v1233
    %1353 = vst.msk [vmem:[%s63] sm:$0xff] %vm1349, %v652
    // Predicated region
    $region194: #{tpu_custom_call.1} parent=1 // pred_check
      _
    $region195: #{tpu_custom_call.1} parent=1 // pred_check_branch
      %1355 = sbr.rel (0) target = $region197
    $region196: #{tpu_custom_call.1} parent=1 // pred_region
      %s1357 = ssub.s32 128, 128
      %1358 = vsyncadd [#allocation5], %s1357
      %s1360 = sshll.u32 [#allocation33], 4
      %s1361 = int_to_ptr.vmem [resolvable:$true] %s1360
      %1363 = dma.vmem_to_hbm [thread:$0]  %s1361, 128, %s59, [#allocation5]
    $region197: #{tpu_custom_call.1} parent=1 // pred_fallthru
      _
    // Predicated region
    $region198: #{tpu_custom_call.1} parent=1 // pred_check
      _
    $region199: #{tpu_custom_call.1} parent=1 // pred_check_branch
      %1365 = sbr.rel (0) target = $region201
    $region200: #{tpu_custom_call.1} parent=1 // pred_region
      _
    $region201: #{tpu_custom_call.1} parent=1 // pred_fallthru
      _
    // Predicated region
    $region202: #{tpu_custom_call.1} parent=1 // pred_check
      _
    $region203: #{tpu_custom_call.1} parent=1 // pred_check_branch
      %1367 = sbr.rel (0) target = $region205
    $region204: #{tpu_custom_call.1} parent=1 // pred_region
      _
    $region205: #{tpu_custom_call.1} parent=1 // pred_fallthru
      _
    // Predicated region
    $region206: #{tpu_custom_call.1} parent=1 // pred_check
      _
    $region207: #{tpu_custom_call.1} parent=1 // pred_check_branch
      %1369 = sbr.rel (0) target = $region209
    $region208: #{tpu_custom_call.1} parent=1 // pred_region
      %1370 = dma.done [#allocation5], 128
    $region209: #{tpu_custom_call.1} parent=1 // pred_fallthru
      _
    // Predicated region
    $region210: #{tpu_custom_call.1} parent=1 // pred_check
      _
    $region211: #{tpu_custom_call.1} parent=1 // pred_check_branch
      %1372 = sbr.rel (0) target = $region213
    $region212: #{tpu_custom_call.1} parent=1 // pred_region
      _
    $region213: #{tpu_custom_call.1} parent=1 // pred_fallthru
      _
    // Predicated region
    $region214: #{tpu_custom_call.1} parent=1 // pred_check
      _
    $region215: #{tpu_custom_call.1} parent=1 // pred_check_branch
      %1374 = sbr.rel (0) target = $region217
    $region216: #{tpu_custom_call.1} parent=1 // pred_region
      _
    $region217: #{tpu_custom_call.1} parent=1 // pred_fallthru
      _
    %1375 = vsyncpa [#allocation4], 1
    %1376 = vsyncpa [#allocation7], 1
    %1377 = vsyncpa [#allocation10], 1
    %1378 = vsyncpa [#allocation13], 1
    %1379 = vsyncpa [#allocation16], 1
    %1380 = vsyncpa [#allocation19], 1
    %1381 = vsyncpa [#allocation22], 1
    %1382 = vsyncpa [#allocation25], 1
    %1383 = vsyncpa [#allocation28], 1
    %1384 = vsyncpa [#allocation31], 1
    %1385 = vsyncpa [#allocation5], 1

</llo_original>
